<compile_context>
chip_gen: v7x
topology: tpu7x:2x2x1
jax: 0.10.0
libtpu: 0.0.40
codegen_flags: <defaults>
</compile_context>

<pallas_src>
import functools

import jax
import jax.numpy as jnp
from jax import lax
from jax.experimental import pallas as pl
from jax.experimental.pallas import tpu as pltpu


def _round_up(x, m):
    return (x + m - 1) // m * m


def _jasper_final_kernel(
    x_hbm, w1_ref, s1_ref, b1_ref, w2_ref, s2_ref, b2_ref, o_ref,
    xpad_ref, dma_sem, *,
    L, L1, K2, d2, pad2, TL, TM, ML, Lx, cin_p, c1_p, c2_p, phases):
    """Fused conv1(BN,ReLU) -> conv2(BN,ReLU) for one (batch, L-tile) grid point.

    x_hbm   : (N, L, cin_p)  channel-padded channels-last input, left in HBM (pl.ANY)
    w*_ref  : (K, Cin_p, Cout_p) tap-major, channel-padded weights (VMEM-resident)
    s/b     : (1, Cout_p)    folded BN scale / shift (f32)
    o_ref   : (1, TL, c2_p)  lane-dense output L-tile (channel padding sliced outside)
    xpad_ref: (Lx, cin_p)    zero-margined input slab, staged once per batch element
    """
    n = pl.program_id(0)
    t = pl.program_id(1)

    # ---- stage the padded input slab ONCE per batch element (t == 0 only) ----
    @pl.when(t == 0)
    def _stage():
        left = ML
        right = Lx - ML - L
        if left > 0:   # zero only the halo margins, not the whole slab
            xpad_ref[pl.ds(0, left), :] = jnp.zeros((left, cin_p), xpad_ref.dtype)
        if right > 0:
            xpad_ref[pl.ds(ML + L, right), :] = jnp.zeros((right, cin_p),
                                                          xpad_ref.dtype)
        # Direct HBM -> slab DMA (no BlockSpec buffer, no VMEM->VMEM re-copy).
        cp = pltpu.make_async_copy(x_hbm.at[n],
                                   xpad_ref.at[pl.ds(ML, L), :],
                                   dma_sem)
        cp.start()
        cp.wait()

    base = pl.multiple_of(t * TL, 8)     # TL is a multiple of 8
    m0 = t * TL - pad2                   # conv1-output row of y1-tile row 0

    # ---- stage 1: dilated conv (phase-grouped taps) -> folded BN -> ReLU ----
    # `phases` is a static tuple of (sublane_phase r, ((tap j, 8-row offset q), ...));
    # one unaligned shifted window per phase, aligned static sub-slices per tap.
    acc1 = jnp.zeros((TM, c1_p), jnp.float32)
    for r, taps in phases:
        qmax = max(q for _, q in taps)
        win = xpad_ref[pl.ds(base + r, TM + 8 * qmax), :]
        for j, q in taps:
            acc1 = acc1 + jnp.dot(win[8 * q:8 * q + TM, :], w1_ref[j],
                                  preferred_element_type=jnp.float32)
    y1 = jnp.maximum(acc1 * s1_ref[...] + b1_ref[...], 0.0)
    # Rows outside conv1's valid output range act as conv2's zero padding.
    m_idx = lax.broadcasted_iota(jnp.int32, (TM, c1_p), 0) + m0
    y1 = jnp.where((m_idx >= 0) & (m_idx < L1), y1, 0.0)
    y1 = y1.astype(w2_ref.dtype)

    # ---- stage 2: conv -> folded BN -> ReLU -> lane-dense output tile ----
    acc2 = jnp.zeros((TL, c2_p), jnp.float32)
    for j in range(K2):
        acc2 = acc2 + jnp.dot(y1[j * d2:j * d2 + TL, :], w2_ref[j],
                              preferred_element_type=jnp.float32)
    y2 = jnp.maximum(acc2 * s2_ref[...] + b2_ref[...], 0.0)
    o_ref[0] = y2.astype(o_ref.dtype)    # full c2_p lanes -> unmasked stores
    # Dropout: identity in eval mode.


def _prep_weight(w_oik, cin_pad, cout_pad, dtype):
    """(Cout, Cin, K) -> (K, Cin_pad, Cout_pad), zero-padded to lane-dense sizes."""
    cout, cin, _ = w_oik.shape
    w = jnp.transpose(w_oik, (2, 1, 0))
    w = jnp.pad(w, ((0, 0), (0, cin_pad - cin), (0, cout_pad - cout)))
    return w.astype(dtype)


def _fold_bn(gamma, beta, mean, var, c_pad, eps):
    scale = gamma / jnp.sqrt(var + eps)
    shift = beta - mean * scale
    c = gamma.shape[0]
    scale = jnp.pad(scale, (0, c_pad - c)).reshape(1, c_pad).astype(jnp.float32)
    shift = jnp.pad(shift, (0, c_pad - c)).reshape(1, c_pad).astype(jnp.float32)
    return scale, shift


def jasper_final_block(x_ncl, params, *, bn_eps=1e-5,
                       compute_dtype=jnp.float32, tl_max=1024,
                       out_dtype=jnp.float32, channels_last_out=False):
    """Fused JasperFinalBlock forward (eval mode). x_ncl: (N, Cin, L) float32."""
    p1, p2 = params["conv1"], params["conv2"]
    N, Cin, L = x_ncl.shape
    C1, _, K1 = p1["w"].shape
    C2, _, K2 = p2["w"].shape
    d1, d2 = 2, 1
    pad1 = 2 * K1 // 2 - 1              # == K1 - 1, exactly as in the PyTorch module
    pad2 = K2 // 2
    L1 = L + 2 * pad1 - d1 * (K1 - 1)   # conv1 output length (stride 1)
    L2 = L1 + 2 * pad2 - d2 * (K2 - 1)  # conv2 output length (stride 1)

    # Lane-dense padded channel sizes (no-op when already multiples of 128).
    cin_p = _round_up(Cin, 128)
    c1_p = _round_up(C1, 128)
    c2_p = _round_up(C2, 128)

    # L tiling of the final output. L2 is padded up to a tile multiple so VMEM
    # usage stays bounded and the grid stays pipelined for awkward lengths.
    tl_cap = max(8, (int(tl_max) // 8) * 8)
    TL = min(_round_up(L2, 8), tl_cap)
    nT = (L2 + TL - 1) // TL
    L2_pad = nT * TL
    TM = TL + d2 * (K2 - 1)             # stage-1 rows needed per output tile
    ML = _round_up(pad1 + pad2, 8)      # sublane-aligned left margin of the slab
    off0 = ML - pad1 - pad2             # in [0, 8): slab offset of conv1's first tap
    need = off0 + L2_pad + d2 * (K2 - 1) + d1 * (K1 - 1)
    Lx = _round_up(max(need, ML + L), 8)

    # Group conv1 taps by sublane phase: tap j starts at base + off0 + j*d1 =
    # base + r + 8*q.  With d1=2 there are at most 4 distinct phases r.
    phase_map = {}
    for j in range(K1):
        s = off0 + j * d1
        phase_map.setdefault(s % 8, []).append((j, s // 8))
    phases = tuple((r, tuple(taps)) for r, taps in sorted(phase_map.items()))

    # Layout plumbing only at the block's external boundary (fuses with the cast):
    # NCL -> NLC, cast, channel-pad so the in-kernel DMA is full lane width.
    x_nlc = jnp.transpose(x_ncl, (0, 2, 1)).astype(compute_dtype)
    x_nlc = jnp.pad(x_nlc, ((0, 0), (0, 0), (0, cin_p - Cin)))

    w1 = _prep_weight(p1["w"], cin_p, c1_p, compute_dtype)
    w2 = _prep_weight(p2["w"], c1_p, c2_p, compute_dtype)
    s1, b1 = _fold_bn(p1["gamma"], p1["beta"], p1["mean"], p1["var"], c1_p, bn_eps)
    s2, b2 = _fold_bn(p2["gamma"], p2["beta"], p2["mean"], p2["var"], c2_p, bn_eps)

    kernel = functools.partial(
        _jasper_final_kernel,
        L=L, L1=L1, K2=K2, d2=d2, pad2=pad2, TL=TL, TM=TM, ML=ML, Lx=Lx,
        cin_p=cin_p, c1_p=c1_p, c2_p=c2_p, phases=phases)

    # VMEM limit: derived from actual buffer sizes, clamped to ~85% of the chip's
    # VMEM (safe on v7x's 64 MiB, allows bigger tiles on v5e/v6e's 128 MiB).
    cb = jnp.dtype(compute_dtype).itemsize
    est = (Lx * cin_p * cb
           + 2 * (K1 * cin_p * c1_p + K2 * c1_p * c2_p) * cb
           + 4 * (c1_p + c2_p) * 4
           + 2 * TL * c2_p * 4
           + 6 * TM * c1_p * 4 + 4 * TL * c2_p * 4
           + (4 << 20))
    try:
        vmem_cap = int(pltpu.get_tpu_info().vmem_capacity_bytes)
    except Exception:
        vmem_cap = 64 << 20
    vmem_limit = int(min(max(est, 32 << 20), int(0.85 * vmem_cap)))

    out_full = pl.pallas_call(
        kernel,
        out_shape=jax.ShapeDtypeStruct((N, L2_pad, c2_p), out_dtype),
        grid_spec=pltpu.PrefetchScalarGridSpec(
            num_scalar_prefetch=0,
            grid=(N, nT),
            in_specs=[
                # Raw input stays in HBM; the kernel DMAs it into the slab once per n.
                pl.BlockSpec(memory_space=pl.ANY),
                pl.BlockSpec((K1, cin_p, c1_p), lambda n, t: (0, 0, 0)),
                pl.BlockSpec((1, c1_p), lambda n, t: (0, 0)),
                pl.BlockSpec((1, c1_p), lambda n, t: (0, 0)),
                pl.BlockSpec((K2, c1_p, c2_p), lambda n, t: (0, 0, 0)),
                pl.BlockSpec((1, c2_p), lambda n, t: (0, 0)),
                pl.BlockSpec((1, c2_p), lambda n, t: (0, 0)),
            ],
            out_specs=pl.BlockSpec((1, TL, c2_p), lambda n, t: (n, t, 0)),
            scratch_shapes=[
                pltpu.VMEM((Lx, cin_p), compute_dtype),   # zero-margined input slab
                pltpu.SemaphoreType.DMA(()),              # slab-staging DMA semaphore
            ],
        ),
        compiler_params=pltpu.CompilerParams(
            # t must be "arbitrary": the slab is staged only at t == 0 per batch.
            dimension_semantics=("parallel", "arbitrary"),
            vmem_limit_bytes=vmem_limit,
        ),
    )(x_nlc, w1, s1, b1, w2, s2, b2)

    out_nlc = out_full[:, :L2, :C2]       # drop tile/channel padding
    if channels_last_out:
        return out_nlc                    # (N, L2, C2) for fused channels-last consumers
    return jnp.transpose(out_nlc, (0, 2, 1))   # (N, C2, L2), matching PyTorch


# ----------------------------- validation helpers -----------------------------

def _ref_conv_block(x, w, gamma, beta, mean, var, *, dilation, padding, eps=1e-5):
    y = lax.conv_general_dilated(
        x, w, window_strides=(1,), padding=[(padding, padding)],
        rhs_dilation=(dilation,), dimension_numbers=("NCH", "OIH", "NCH"))
    scale = gamma / jnp.sqrt(var + eps)
    shift = beta - mean * scale
    y = y * scale[None, :, None] + shift[None, :, None]
    return jnp.maximum(y, 0.0)


def _ref_jasper_final(x, params, eps=1e-5):
    p1, p2 = params["conv1"], params["conv2"]
    k1, k2 = p1["w"].shape[2], p2["w"].shape[2]
    y = _ref_conv_block(x, p1["w"], p1["gamma"], p1["beta"], p1["mean"], p1["var"],
                        dilation=2, padding=2 * k1 // 2 - 1, eps=eps)
    y = _ref_conv_block(y, p2["w"], p2["gamma"], p2["beta"], p2["mean"], p2["var"],
                        dilation=1, padding=k2 // 2, eps=eps)
    return y


def _make_params(key, in_channels, channels, kernel_sizes):
    c1, c2 = channels[-2], channels[-1]
    k1, k2 = kernel_sizes[-2], kernel_sizes[-1]
    ks = jax.random.split(key, 10)

    def bn(kg, kb, km, kv, c):
        return dict(
            gamma=1.0 + 0.1 * jax.random.normal(kg, (c,), jnp.float32),
            beta=0.1 * jax.random.normal(kb, (c,), jnp.float32),
            mean=0.1 * jax.random.normal(km, (c,), jnp.float32),
            var=jnp.abs(jax.random.normal(kv, (c,), jnp.float32)) + 0.5,
        )

    p1 = dict(w=0.1 * jax.random.normal(ks[0], (c1, in_channels, k1), jnp.float32),
              **bn(ks[1], ks[2], ks[3], ks[4], c1))
    p2 = dict(w=0.1 * jax.random.normal(ks[5], (c2, c1, k2), jnp.float32),
              **bn(ks[6], ks[7], ks[8], ks[9], c2))
    return {"conv1": p1, "conv2": p2}


if __name__ == "__main__":
    key = jax.random.PRNGKey(0)
    k_x, k_p = jax.random.split(key)

    # Small synthetic config consistent with JasperFinalBlock.
    N, in_channels, L = 2, 32, 16
    channels = [48, 64]
    kernel_sizes = [5, 3]
    # dropout_rates = [0.1, 0.1]  # identity in eval mode

    x = jax.random.normal(k_x, (N, in_channels, L), jnp.float32)
    params = _make_params(k_p, in_channels, channels, kernel_sizes)

    ref = _ref_jasper_final(x, params)

    fwd = jax.jit(jasper_final_block,
                  static_argnames=("compute_dtype", "tl_max", "out_dtype",
                                   "channels_last_out"))

    # f32 path with a small L tile so the multi-tile / halo / slab-reuse path runs.
    out = jax.block_until_ready(fwd(x, params, compute_dtype=jnp.float32, tl_max=8))
    assert out.shape == ref.shape == (N, channels[-1], L), (out.shape, ref.shape)
    assert jnp.allclose(out, ref, atol=1e-4, rtol=1e-4), float(jnp.max(jnp.abs(out - ref)))

    # bf16 matmul path (f32 MXU accumulation), default large L tile (single tile here).
    out_bf16 = jax.block_until_ready(fwd(x, params, compute_dtype=jnp.bfloat16))
    assert out_bf16.shape == ref.shape
    assert jnp.allclose(out_bf16, ref, atol=2e-1, rtol=5e-2), \
        float(jnp.max(jnp.abs(out_bf16 - ref)))

    print("KERNEL_OK")
</pallas_src>

<mosaic_0001>
module attributes {stable_mosaic.version = 11 : i64} {
  func.func @_jasper_final_kernel(%arg0: i32, %arg1: i32, %arg2: memref<2x16x128xf32, #tpu.memory_space<any>>, %arg3: memref<5x128x128xf32, #tpu.memory_space<vmem>>, %arg4: memref<1x128xf32, #tpu.memory_space<vmem>>, %arg5: memref<1x128xf32, #tpu.memory_space<vmem>>, %arg6: memref<3x128x128xf32, #tpu.memory_space<vmem>>, %arg7: memref<1x128xf32, #tpu.memory_space<vmem>>, %arg8: memref<1x128xf32, #tpu.memory_space<vmem>>, %arg9: memref<1x8x128xf32, #tpu.memory_space<vmem>>, %arg10: memref<32x128xf32, #tpu.memory_space<vmem>>, %arg11: memref<!tpu.dma_semaphore, #tpu.memory_space<semaphore_mem>>) attributes {dimension_semantics = [#tpu.dimension_semantics<parallel>, #tpu.dimension_semantics<arbitrary>], iteration_bounds = array<i64: 2, 2>, scalar_prefetch = 0 : i64, scratch_operands = 2 : i64, tpu.core_type = #tpu.core_type<tc>, window_params = [{}, {pipeline_mode = #tpu.pipeline_mode<synchronous>, transform_indices = @transform_1, window_bounds = array<i64: 5, 128, 128>}, {pipeline_mode = #tpu.pipeline_mode<synchronous>, transform_indices = @transform_2, window_bounds = array<i64: 1, 128>}, {pipeline_mode = #tpu.pipeline_mode<synchronous>, transform_indices = @transform_3, window_bounds = array<i64: 1, 128>}, {pipeline_mode = #tpu.pipeline_mode<synchronous>, transform_indices = @transform_4, window_bounds = array<i64: 3, 128, 128>}, {pipeline_mode = #tpu.pipeline_mode<synchronous>, transform_indices = @transform_5, window_bounds = array<i64: 1, 128>}, {pipeline_mode = #tpu.pipeline_mode<synchronous>, transform_indices = @transform_6, window_bounds = array<i64: 1, 128>}, {transform_indices = @transform_7, window_bounds = array<i64: 1, 8, 128>}]} {
    %c0_i32 = arith.constant 0 : i32
    %0 = arith.cmpi eq, %arg1, %c0_i32 : i32
    %1 = arith.extui %0 : i1 to i32
    %c0_i32_0 = arith.constant 0 : i32
    %2 = arith.cmpi ne, %1, %c0_i32_0 : i32
    scf.if %2 {
      %cst_50 = arith.constant 0.000000e+00 : f32
      %88 = vector.broadcast %cst_50 : f32 to vector<8x128xf32>
      %c0_51 = arith.constant 0 : index
      %c0_52 = arith.constant 0 : index
      %89 = vector.load %arg10[%c0_51, %c0_52] : memref<32x128xf32, #tpu.memory_space<vmem>>, vector<8x128xf32>
      tpu.vector_store %arg10[%c0_51, %c0_52], %88 {strides = array<i32>} : memref<32x128xf32, #tpu.memory_space<vmem>>, vector<8x128xf32>,
      %cst_53 = arith.constant 0.000000e+00 : f32
      %90 = vector.broadcast %cst_53 : f32 to vector<8x128xf32>
      %c24 = arith.constant 24 : index
      %c0_54 = arith.constant 0 : index
      %91 = vector.load %arg10[%c24, %c0_54] : memref<32x128xf32, #tpu.memory_space<vmem>>, vector<8x128xf32>
      tpu.vector_store %arg10[%c24, %c0_54], %90 {strides = array<i32>} : memref<32x128xf32, #tpu.memory_space<vmem>>, vector<8x128xf32>,
      %c0_i32_55 = arith.constant 0 : i32
      %c0_i32_56 = arith.constant 0 : i32
      %92 = tpu.memref_slice %arg2[%arg0, %c0_i32_55, %c0_i32_56] : memref<2x16x128xf32, #tpu.memory_space<any>> -> memref<1x16x128xf32, #tpu.memory_space<any>>
      %93 = tpu.memref_squeeze %92 : memref<1x16x128xf32, #tpu.memory_space<any>> -> memref<16x128xf32, #tpu.memory_space<any>>
      %c8_i32_57 = arith.constant 8 : i32
      %c0_i32_58 = arith.constant 0 : i32
      %94 = tpu.memref_slice %arg10[%c8_i32_57, %c0_i32_58] : memref<32x128xf32, #tpu.memory_space<vmem>> -> memref<16x128xf32, #tpu.memory_space<vmem>>
      tpu.enqueue_dma source(%93 : memref<16x128xf32, #tpu.memory_space<any>>) target(%94 : memref<16x128xf32, #tpu.memory_space<vmem>>) target_semaphore(%arg11 : memref<!tpu.dma_semaphore, #tpu.memory_space<semaphore_mem>>)
      %c0_i32_59 = arith.constant 0 : i32
      %c0_i32_60 = arith.constant 0 : i32
      %95 = tpu.memref_slice %arg2[%arg0, %c0_i32_59, %c0_i32_60] : memref<2x16x128xf32, #tpu.memory_space<any>> -> memref<1x16x128xf32, #tpu.memory_space<any>>
      %96 = tpu.memref_squeeze %95 : memref<1x16x128xf32, #tpu.memory_space<any>> -> memref<16x128xf32, #tpu.memory_space<any>>
      %c8_i32_61 = arith.constant 8 : i32
      %c0_i32_62 = arith.constant 0 : i32
      %97 = tpu.memref_slice %arg10[%c8_i32_61, %c0_i32_62] : memref<32x128xf32, #tpu.memory_space<vmem>> -> memref<16x128xf32, #tpu.memory_space<vmem>>
      tpu.wait_dma2 semaphore(%arg11 : memref<!tpu.dma_semaphore, #tpu.memory_space<semaphore_mem>>) src(%96 : memref<16x128xf32, #tpu.memory_space<any>>) dst(%97 : memref<16x128xf32, #tpu.memory_space<vmem>>)
    } else {
    }
    %c8_i32 = arith.constant 8 : i32
    %3 = arith.muli %arg1, %c8_i32 : i32
    %4 = tpu.assume_multiple %3, 8 : i32
    %c8_i32_1 = arith.constant 8 : i32
    %5 = arith.muli %arg1, %c8_i32_1 : i32
    %c1_i32 = arith.constant 1 : i32
    %6 = arith.subi %5, %c1_i32 : i32
    %cst = arith.constant 0.000000e+00 : f32
    %7 = vector.broadcast %cst : f32 to vector<10x128xf32>
    %c1_i32_2 = arith.constant 1 : i32
    %8 = arith.addi %4, %c1_i32_2 : i32
    %9 = arith.index_cast %8 : i32 to index
    %c0 = arith.constant 0 : index
    %10 = vector.load %arg10[%9, %c0] : memref<32x128xf32, #tpu.memory_space<vmem>>, vector<18x128xf32>
    %11 = vector.extract_strided_slice %10 {offsets = [8, 0], sizes = [10, 128], strides = [1, 1]} : vector<18x128xf32> to vector<10x128xf32>
    %c3 = arith.constant 3 : index
    %c0_3 = arith.constant 0 : index
    %c0_4 = arith.constant 0 : index
    %12 = vector.load %arg3[%c3, %c0_3, %c0_4] : memref<5x128x128xf32, #tpu.memory_space<vmem>>, vector<1x128x128xf32>
    %13 = vector.shape_cast %12 : vector<1x128x128xf32> to vector<128x128xf32>
    %cst_5 = arith.constant dense<0.000000e+00> : vector<10x128xf32>
    %14 = tpu.matmul %11, %13, %cst_5 {dimension_numbers = #tpu.dot_dimension_numbers<[1], [0], [0], [1], [0, 0, 1, 1], [], []>} : vector<10x128xf32>, vector<128x128xf32>, vector<10x128xf32> -> vector<10x128xf32>
    %15 = arith.addf %7, %14 : vector<10x128xf32>
    %c3_i32 = arith.constant 3 : i32
    %16 = arith.addi %4, %c3_i32 : i32
    %17 = arith.index_cast %16 : i32 to index
    %c0_6 = arith.constant 0 : index
    %18 = vector.load %arg10[%17, %c0_6] : memref<32x128xf32, #tpu.memory_space<vmem>>, vector<18x128xf32>
    %19 = vector.extract_strided_slice %18 {offsets = [0, 0], sizes = [10, 128], strides = [1, 1]} : vector<18x128xf32> to vector<10x128xf32>
    %c0_7 = arith.constant 0 : index
    %c0_8 = arith.constant 0 : index
    %c0_9 = arith.constant 0 : index
    %20 = vector.load %arg3[%c0_7, %c0_8, %c0_9] : memref<5x128x128xf32, #tpu.memory_space<vmem>>, vector<1x128x128xf32>
    %21 = vector.shape_cast %20 : vector<1x128x128xf32> to vector<128x128xf32>
    %cst_10 = arith.constant dense<0.000000e+00> : vector<10x128xf32>
    %22 = tpu.matmul %19, %21, %cst_10 {dimension_numbers = #tpu.dot_dimension_numbers<[1], [0], [0], [1], [0, 0, 1, 1], [], []>} : vector<10x128xf32>, vector<128x128xf32>, vector<10x128xf32> -> vector<10x128xf32>
    %23 = arith.addf %15, %22 : vector<10x128xf32>
    %24 = vector.extract_strided_slice %18 {offsets = [8, 0], sizes = [10, 128], strides = [1, 1]} : vector<18x128xf32> to vector<10x128xf32>
    %c4 = arith.constant 4 : index
    %c0_11 = arith.constant 0 : index
    %c0_12 = arith.constant 0 : index
    %25 = vector.load %arg3[%c4, %c0_11, %c0_12] : memref<5x128x128xf32, #tpu.memory_space<vmem>>, vector<1x128x128xf32>
    %26 = vector.shape_cast %25 : vector<1x128x128xf32> to vector<128x128xf32>
    %cst_13 = arith.constant dense<0.000000e+00> : vector<10x128xf32>
    %27 = tpu.matmul %24, %26, %cst_13 {dimension_numbers = #tpu.dot_dimension_numbers<[1], [0], [0], [1], [0, 0, 1, 1], [], []>} : vector<10x128xf32>, vector<128x128xf32>, vector<10x128xf32> -> vector<10x128xf32>
    %28 = arith.addf %23, %27 : vector<10x128xf32>
    %c5_i32 = arith.constant 5 : i32
    %29 = arith.addi %4, %c5_i32 : i32
    %30 = arith.index_cast %29 : i32 to index
    %c0_14 = arith.constant 0 : index
    %31 = vector.load %arg10[%30, %c0_14] : memref<32x128xf32, #tpu.memory_space<vmem>>, vector<10x128xf32>
    %c1 = arith.constant 1 : index
    %c0_15 = arith.constant 0 : index
    %c0_16 = arith.constant 0 : index
    %32 = vector.load %arg3[%c1, %c0_15, %c0_16] : memref<5x128x128xf32, #tpu.memory_space<vmem>>, vector<1x128x128xf32>
    %33 = vector.shape_cast %32 : vector<1x128x128xf32> to vector<128x128xf32>
    %cst_17 = arith.constant dense<0.000000e+00> : vector<10x128xf32>
    %34 = tpu.matmul %31, %33, %cst_17 {dimension_numbers = #tpu.dot_dimension_numbers<[1], [0], [0], [1], [0, 0, 1, 1], [], []>} : vector<10x128xf32>, vector<128x128xf32>, vector<10x128xf32> -> vector<10x128xf32>
    %35 = arith.addf %28, %34 : vector<10x128xf32>
    %c7_i32 = arith.constant 7 : i32
    %36 = arith.addi %4, %c7_i32 : i32
    %37 = arith.index_cast %36 : i32 to index
    %c0_18 = arith.constant 0 : index
    %38 = vector.load %arg10[%37, %c0_18] : memref<32x128xf32, #tpu.memory_space<vmem>>, vector<10x128xf32>
    %c2 = arith.constant 2 : index
    %c0_19 = arith.constant 0 : index
    %c0_20 = arith.constant 0 : index
    %39 = vector.load %arg3[%c2, %c0_19, %c0_20] : memref<5x128x128xf32, #tpu.memory_space<vmem>>, vector<1x128x128xf32>
    %40 = vector.shape_cast %39 : vector<1x128x128xf32> to vector<128x128xf32>
    %cst_21 = arith.constant dense<0.000000e+00> : vector<10x128xf32>
    %41 = tpu.matmul %38, %40, %cst_21 {dimension_numbers = #tpu.dot_dimension_numbers<[1], [0], [0], [1], [0, 0, 1, 1], [], []>} : vector<10x128xf32>, vector<128x128xf32>, vector<10x128xf32> -> vector<10x128xf32>
    %42 = arith.addf %35, %41 : vector<10x128xf32>
    %c0_22 = arith.constant 0 : index
    %c0_23 = arith.constant 0 : index
    %43 = vector.load %arg4[%c0_22, %c0_23] : memref<1x128xf32, #tpu.memory_space<vmem>>, vector<1x128xf32>
    %44 = vector.broadcast %43 : vector<1x128xf32> to vector<10x128xf32>
    %45 = arith.mulf %42, %44 : vector<10x128xf32>
    %c0_24 = arith.constant 0 : index
    %c0_25 = arith.constant 0 : index
    %46 = vector.load %arg5[%c0_24, %c0_25] : memref<1x128xf32, #tpu.memory_space<vmem>>, vector<1x128xf32>
    %47 = vector.broadcast %46 : vector<1x128xf32> to vector<10x128xf32>
    %48 = arith.addf %45, %47 : vector<10x128xf32>
    %cst_26 = arith.constant 0.000000e+00 : f32
    %49 = vector.broadcast %cst_26 : f32 to vector<10x128xf32>
    %50 = arith.maximumf %48, %49 : vector<10x128xf32>
    %51 = tpu.iota {dimensions = array<i32: 0>} : vector<10x128xi32>
    %52 = vector.broadcast %6 : i32 to vector<10x128xi32>
    %53 = arith.addi %51, %52 : vector<10x128xi32>
    %c0_i32_27 = arith.constant 0 : i32
    %54 = vector.broadcast %c0_i32_27 : i32 to vector<10x128xi32>
    %55 = arith.cmpi sge, %53, %54 : vector<10x128xi32>
    %c16_i32 = arith.constant 16 : i32
    %56 = vector.broadcast %c16_i32 : i32 to vector<10x128xi32>
    %57 = arith.cmpi slt, %53, %56 : vector<10x128xi32>
    %58 = arith.andi %55, %57 : vector<10x128xi1>
    %cst_28 = arith.constant 0.000000e+00 : f32
    %59 = vector.broadcast %cst_28 : f32 to vector<10x128xf32>
    %60 = arith.select %58, %50, %59 : vector<10x128xi1>, vector<10x128xf32>
    %cst_29 = arith.constant 0.000000e+00 : f32
    %61 = vector.broadcast %cst_29 : f32 to vector<8x128xf32>
    %62 = vector.extract_strided_slice %60 {offsets = [0, 0], sizes = [8, 128], strides = [1, 1]} : vector<10x128xf32> to vector<8x128xf32>
    %c0_30 = arith.constant 0 : index
    %c0_31 = arith.constant 0 : index
    %c0_32 = arith.constant 0 : index
    %63 = vector.load %arg6[%c0_30, %c0_31, %c0_32] : memref<3x128x128xf32, #tpu.memory_space<vmem>>, vector<1x128x128xf32>
    %64 = vector.shape_cast %63 : vector<1x128x128xf32> to vector<128x128xf32>
    %cst_33 = arith.constant dense<0.000000e+00> : vector<8x128xf32>
    %65 = tpu.matmul %62, %64, %cst_33 {dimension_numbers = #tpu.dot_dimension_numbers<[1], [0], [0], [1], [0, 0, 1, 1], [], []>} : vector<8x128xf32>, vector<128x128xf32>, vector<8x128xf32> -> vector<8x128xf32>
    %66 = arith.addf %61, %65 : vector<8x128xf32>
    %67 = vector.extract_strided_slice %60 {offsets = [1, 0], sizes = [8, 128], strides = [1, 1]} : vector<10x128xf32> to vector<8x128xf32>
    %c1_34 = arith.constant 1 : index
    %c0_35 = arith.constant 0 : index
    %c0_36 = arith.constant 0 : index
    %68 = vector.load %arg6[%c1_34, %c0_35, %c0_36] : memref<3x128x128xf32, #tpu.memory_space<vmem>>, vector<1x128x128xf32>
    %69 = vector.shape_cast %68 : vector<1x128x128xf32> to vector<128x128xf32>
    %cst_37 = arith.constant dense<0.000000e+00> : vector<8x128xf32>
    %70 = tpu.matmul %67, %69, %cst_37 {dimension_numbers = #tpu.dot_dimension_numbers<[1], [0], [0], [1], [0, 0, 1, 1], [], []>} : vector<8x128xf32>, vector<128x128xf32>, vector<8x128xf32> -> vector<8x128xf32>
    %71 = arith.addf %66, %70 : vector<8x128xf32>
    %72 = vector.extract_strided_slice %60 {offsets = [2, 0], sizes = [8, 128], strides = [1, 1]} : vector<10x128xf32> to vector<8x128xf32>
    %c2_38 = arith.constant 2 : index
    %c0_39 = arith.constant 0 : index
    %c0_40 = arith.constant 0 : index
    %73 = vector.load %arg6[%c2_38, %c0_39, %c0_40] : memref<3x128x128xf32, #tpu.memory_space<vmem>>, vector<1x128x128xf32>
    %74 = vector.shape_cast %73 : vector<1x128x128xf32> to vector<128x128xf32>
    %cst_41 = arith.constant dense<0.000000e+00> : vector<8x128xf32>
    %75 = tpu.matmul %72, %74, %cst_41 {dimension_numbers = #tpu.dot_dimension_numbers<[1], [0], [0], [1], [0, 0, 1, 1], [], []>} : vector<8x128xf32>, vector<128x128xf32>, vector<8x128xf32> -> vector<8x128xf32>
    %76 = arith.addf %71, %75 : vector<8x128xf32>
    %c0_42 = arith.constant 0 : index
    %c0_43 = arith.constant 0 : index
    %77 = vector.load %arg7[%c0_42, %c0_43] : memref<1x128xf32, #tpu.memory_space<vmem>>, vector<1x128xf32>
    %78 = vector.broadcast %77 : vector<1x128xf32> to vector<8x128xf32>
    %79 = arith.mulf %76, %78 : vector<8x128xf32>
    %c0_44 = arith.constant 0 : index
    %c0_45 = arith.constant 0 : index
    %80 = vector.load %arg8[%c0_44, %c0_45] : memref<1x128xf32, #tpu.memory_space<vmem>>, vector<1x128xf32>
    %81 = vector.broadcast %80 : vector<1x128xf32> to vector<8x128xf32>
    %82 = arith.addf %79, %81 : vector<8x128xf32>
    %cst_46 = arith.constant 0.000000e+00 : f32
    %83 = vector.broadcast %cst_46 : f32 to vector<8x128xf32>
    %84 = arith.maximumf %82, %83 : vector<8x128xf32>
    %c0_47 = arith.constant 0 : index
    %c0_48 = arith.constant 0 : index
    %c0_49 = arith.constant 0 : index
    %85 = vector.load %arg9[%c0_47, %c0_48, %c0_49] : memref<1x8x128xf32, #tpu.memory_space<vmem>>, vector<1x8x128xf32>
    %86 = vector.shape_cast %85 : vector<1x8x128xf32> to vector<8x128xf32>
    %87 = vector.shape_cast %84 : vector<8x128xf32> to vector<1x8x128xf32>
    tpu.vector_store %arg9[%c0_47, %c0_48, %c0_49], %87 {strides = array<i32>} : memref<1x8x128xf32, #tpu.memory_space<vmem>>, vector<1x8x128xf32>,
    return
  }
  func.func @transform_1(%arg0: i32, %arg1: i32) -> (i32, i32, i32) {
    %c0_i32 = arith.constant 0 : i32
    %c0_i32_0 = arith.constant 0 : i32
    %c0_i32_1 = arith.constant 0 : i32
    %c0_i32_2 = arith.constant 0 : i32
    return %c0_i32, %c0_i32_0, %c0_i32_1 : i32, i32, i32
  }
  func.func @transform_2(%arg0: i32, %arg1: i32) -> (i32, i32) {
    %c0_i32 = arith.constant 0 : i32
    %c0_i32_0 = arith.constant 0 : i32
    %c0_i32_1 = arith.constant 0 : i32
    return %c0_i32, %c0_i32_0 : i32, i32
  }
  func.func @transform_3(%arg0: i32, %arg1: i32) -> (i32, i32) {
    %c0_i32 = arith.constant 0 : i32
    %c0_i32_0 = arith.constant 0 : i32
    %c0_i32_1 = arith.constant 0 : i32
    return %c0_i32, %c0_i32_0 : i32, i32
  }
  func.func @transform_4(%arg0: i32, %arg1: i32) -> (i32, i32, i32) {
    %c0_i32 = arith.constant 0 : i32
    %c0_i32_0 = arith.constant 0 : i32
    %c0_i32_1 = arith.constant 0 : i32
    %c0_i32_2 = arith.constant 0 : i32
    return %c0_i32, %c0_i32_0, %c0_i32_1 : i32, i32, i32
  }
  func.func @transform_5(%arg0: i32, %arg1: i32) -> (i32, i32) {
    %c0_i32 = arith.constant 0 : i32
    %c0_i32_0 = arith.constant 0 : i32
    %c0_i32_1 = arith.constant 0 : i32
    return %c0_i32, %c0_i32_0 : i32, i32
  }
  func.func @transform_6(%arg0: i32, %arg1: i32) -> (i32, i32) {
    %c0_i32 = arith.constant 0 : i32
    %c0_i32_0 = arith.constant 0 : i32
    %c0_i32_1 = arith.constant 0 : i32
    return %c0_i32, %c0_i32_0 : i32, i32
  }
  func.func @transform_7(%arg0: i32, %arg1: i32) -> (i32, i32, i32) {
    %c0_i32 = arith.constant 0 : i32
    %c0_i32_0 = arith.constant 0 : i32
    return %arg0, %arg1, %c0_i32 : i32, i32, i32
  }
}

</mosaic_0001>

<llo_original>
// kernel: jasper_final_block.1
$region0: #{jasper_final_block.1}
  #allocation0 [shape = 'u32[]', space=smem, size = 0x4, offset = 0x4, fixed_abs, tag = 'smem constant byte address 0x4 - core index']
  #allocation1 [shape = 'u32[144,128]{1,0:T(1,128)}', space=vmem, size = 0x12000, scoped, tag = 'internal scratch']
  #allocation2 [shape = 'f32[32,128]{1,0:T(8,128)}', space=vmem, size = 0x4000, scoped, tag = 'scratch operand']
  #allocation3 [shape = 's32[1]{0}', space=sflag, size = 0x4, scoped, tag = 'scratch operand']
  #allocation4 [shape = 's32[]', space=sflag, size = 0x4, offset = 0, fixed_abs, tag = 'sflag constant byte address 0x0 - dummy sync flag']
  %s0 = inlined_call_operand.vmem [shape: f32[2,16,128], index: 0, kind: input, shape index: {}]
  %s1 = inlined_call_operand.vmem [shape: f32[5,128,128], index: 1, kind: input, shape index: {}]
  %s2 = inlined_call_operand.vmem [shape: f32[1,128], index: 2, kind: input, shape index: {}]
  %s3 = inlined_call_operand.vmem [shape: f32[1,128], index: 3, kind: input, shape index: {}]
  %s4 = inlined_call_operand.vmem [shape: f32[3,128,128], index: 4, kind: input, shape index: {}]
  %s5 = inlined_call_operand.vmem [shape: f32[1,128], index: 5, kind: input, shape index: {}]
  %s6 = inlined_call_operand.vmem [shape: f32[1,128], index: 6, kind: input, shape index: {}]
  %s7 = inlined_call_operand.vmem [shape: f32[2,16,128], index: 7, kind: output, shape index: {}]
  %s8 = sld [smem:[#allocation0]]
  $region95: #{jasper_final_block.1} parent=0
    _
  %s10 = ssub.s32 1, %s8
  %s11 = scalar_select 0, %s10, %s8
  loop: start=0, step=1, limit=6
  $region2: #{jasper_final_block.1} parent=0 // loop_pre_header
    _
  $region3: #{jasper_final_block.1} parent=0 // loop_header
    %s13 = sphi 0, %s17
    %p14 = scmp.ge.s32.totalorder %s13, 6
    %s20 = sphi 0, %s32
    %s21 = sphi 0, %s28
    %s22 = sphi 0, %s20
    %s23 = sphi 0, %s21
    %s24 = sphi 0, %s22
    %s25 = sphi 0, %s23
    %s33 = sphi 0, %s33
    %s35 = sphi 0, %s33
    %s36 = sphi 0, %s35
    %s50 = sphi 0, %s36
    %s54 = sphi 0, %s54
    %s56 = sphi 0, %s54
    %s57 = sphi 0, %s56
    %s71 = sphi 0, %s57
    %s75 = sphi 0, %s75
    %s77 = sphi 0, %s75
    %s78 = sphi 0, %s77
    %s92 = sphi 0, %s78
    %s96 = sphi 0, %s96
    %s98 = sphi 0, %s96
    %s99 = sphi 0, %s98
    %s113 = sphi 0, %s99
    %s117 = sphi 0, %s117
    %s119 = sphi 0, %s117
    %s120 = sphi 0, %s119
    %s134 = sphi 0, %s120
    %s138 = sphi 0, %s138
    %s140 = sphi 0, %s138
    %s141 = sphi 0, %s140
    %s155 = sphi 0, %s141
    %s163 = sphi 0, %s165
    %s166 = sphi 0, %s163
    %s167 = sphi 0, %s166
    %s183 = sphi 0, %s167
  $region4: #{jasper_final_block.1} parent=0 // loop_header_branch
    %16 = sbr.rel (%p14) target = $region8
  $region5: #{jasper_final_block.1} parent=0 // loop_body
    %s18 = ssub.s32 %s13, 1
    %s19 = ssub.s32 %s13, 2
    %s26 = sadd.s32 1, %s21
    %p27 = scmp.ge.s32.totalorder %s26, 2
    %s28 = scalar_select %p27, 0, %s26
    %s29 = sadd.s32 1, %s20
    %s30 = scalar_select %p27, %s29, %s20
    %p31 = scmp.ge.s32.totalorder %s30, 2
    %s32 = scalar_select %p31, 0, %s30
    %s34 = sadd.s32 %s33, 1
    %p37 = scmp.eq.s32.totalorder %s13, 3
    %p38 = scmp.ne.s32.totalorder %s33, %s35
    %p39 = scmp.eq.s32.totalorder %s13, 0
    %p40 = por %p38, %p39
    %p41 = scmp.ne.s32.totalorder %s33, %s35
    %p42 = scmp.eq.s32.totalorder %s18, 3
    %p43 = por %p41, %p42
    %p44 = scmp.ne.s32.totalorder %s35, %s36
    %p45 = scmp.eq.s32.totalorder %s18, 0
    %p46 = por %p44, %p45
    %p47 = scmp.ne.s32.totalorder %s35, %s36
    %p48 = scmp.eq.s32.totalorder %s19, 3
    %p49 = por %p47, %p48
    %p51 = scmp.ne.s32.totalorder %s36, %s50
    %p52 = scmp.eq.s32.totalorder %s19, 0
    %p53 = por %p51, %p52
    %s55 = sadd.s32 %s54, 1
    %p58 = scmp.eq.s32.totalorder %s13, 3
    %p59 = scmp.ne.s32.totalorder %s54, %s56
    %p60 = scmp.eq.s32.totalorder %s13, 0
    %p61 = por %p59, %p60
    %p62 = scmp.ne.s32.totalorder %s54, %s56
    %p63 = scmp.eq.s32.totalorder %s18, 3
    %p64 = por %p62, %p63
    %p65 = scmp.ne.s32.totalorder %s56, %s57
    %p66 = scmp.eq.s32.totalorder %s18, 0
    %p67 = por %p65, %p66
    %p68 = scmp.ne.s32.totalorder %s56, %s57
    %p69 = scmp.eq.s32.totalorder %s19, 3
    %p70 = por %p68, %p69
    %p72 = scmp.ne.s32.totalorder %s57, %s71
    %p73 = scmp.eq.s32.totalorder %s19, 0
    %p74 = por %p72, %p73
    %s76 = sadd.s32 %s75, 1
    %p79 = scmp.eq.s32.totalorder %s13, 3
    %p80 = scmp.ne.s32.totalorder %s75, %s77
    %p81 = scmp.eq.s32.totalorder %s13, 0
    %p82 = por %p80, %p81
    %p83 = scmp.ne.s32.totalorder %s75, %s77
    %p84 = scmp.eq.s32.totalorder %s18, 3
    %p85 = por %p83, %p84
    %p86 = scmp.ne.s32.totalorder %s77, %s78
    %p87 = scmp.eq.s32.totalorder %s18, 0
    %p88 = por %p86, %p87
    %p89 = scmp.ne.s32.totalorder %s77, %s78
    %p90 = scmp.eq.s32.totalorder %s19, 3
    %p91 = por %p89, %p90
    %p93 = scmp.ne.s32.totalorder %s78, %s92
    %p94 = scmp.eq.s32.totalorder %s19, 0
    %p95 = por %p93, %p94
    %s97 = sadd.s32 %s96, 1
    %p100 = scmp.eq.s32.totalorder %s13, 3
    %p101 = scmp.ne.s32.totalorder %s96, %s98
    %p102 = scmp.eq.s32.totalorder %s13, 0
    %p103 = por %p101, %p102
    %p104 = scmp.ne.s32.totalorder %s96, %s98
    %p105 = scmp.eq.s32.totalorder %s18, 3
    %p106 = por %p104, %p105
    %p107 = scmp.ne.s32.totalorder %s98, %s99
    %p108 = scmp.eq.s32.totalorder %s18, 0
    %p109 = por %p107, %p108
    %p110 = scmp.ne.s32.totalorder %s98, %s99
    %p111 = scmp.eq.s32.totalorder %s19, 3
    %p112 = por %p110, %p111
    %p114 = scmp.ne.s32.totalorder %s99, %s113
    %p115 = scmp.eq.s32.totalorder %s19, 0
    %p116 = por %p114, %p115
    %s118 = sadd.s32 %s117, 1
    %p121 = scmp.eq.s32.totalorder %s13, 3
    %p122 = scmp.ne.s32.totalorder %s117, %s119
    %p123 = scmp.eq.s32.totalorder %s13, 0
    %p124 = por %p122, %p123
    %p125 = scmp.ne.s32.totalorder %s117, %s119
    %p126 = scmp.eq.s32.totalorder %s18, 3
    %p127 = por %p125, %p126
    %p128 = scmp.ne.s32.totalorder %s119, %s120
    %p129 = scmp.eq.s32.totalorder %s18, 0
    %p130 = por %p128, %p129
    %p131 = scmp.ne.s32.totalorder %s119, %s120
    %p132 = scmp.eq.s32.totalorder %s19, 3
    %p133 = por %p131, %p132
    %p135 = scmp.ne.s32.totalorder %s120, %s134
    %p136 = scmp.eq.s32.totalorder %s19, 0
    %p137 = por %p135, %p136
    %s139 = sadd.s32 %s138, 1
    %p142 = scmp.eq.s32.totalorder %s13, 3
    %p143 = scmp.ne.s32.totalorder %s138, %s140
    %p144 = scmp.eq.s32.totalorder %s13, 0
    %p145 = por %p143, %p144
    %p146 = scmp.ne.s32.totalorder %s138, %s140
    %p147 = scmp.eq.s32.totalorder %s18, 3
    %p148 = por %p146, %p147
    %p149 = scmp.ne.s32.totalorder %s140, %s141
    %p150 = scmp.eq.s32.totalorder %s18, 0
    %p151 = por %p149, %p150
    %p152 = scmp.ne.s32.totalorder %s140, %s141
    %p153 = scmp.eq.s32.totalorder %s19, 3
    %p154 = por %p152, %p153
    %p156 = scmp.ne.s32.totalorder %s141, %s155
    %p157 = scmp.eq.s32.totalorder %s19, 0
    %p158 = por %p156, %p157
    %s159 = ssub.s32 %s20, %s32
    %s160 = ssub.s32 %s21, %s28
    %s161 = sor.u32 %s159, %s160
    %p162 = scmp.eq.s32.totalorder %s161, 0
    %s164 = sadd.s32 %s163, 1
    %s165 = scalar_select %p162, %s163, %s164
    %p168 = pneg %p162
    %p169 = scmp.eq.s32.totalorder %s13, 3
    %p170 = por %p168, %p169
    %p171 = scmp.ne.s32.totalorder %s163, %s166
    %p172 = scmp.eq.s32.totalorder %s13, 0
    %p173 = por %p171, %p172
    %p174 = scmp.ne.s32.totalorder %s163, %s166
    %p175 = scmp.eq.s32.totalorder %s18, 3
    %p176 = por %p174, %p175
    %p177 = scmp.ne.s32.totalorder %s166, %s167
    %p178 = scmp.eq.s32.totalorder %s18, 0
    %p179 = por %p177, %p178
    %p180 = scmp.ne.s32.totalorder %s166, %s167
    %p181 = scmp.eq.s32.totalorder %s19, 3
    %p182 = por %p180, %p181
    %p184 = scmp.ne.s32.totalorder %s167, %s183
    %p185 = scmp.eq.s32.totalorder %s19, 0
    %p186 = por %p184, %p185
    %p187 = scmp.le.s32.totalorder 1, %s13
    %p188 = scmp.lt.s32.totalorder %s13, 5
    %p189 = pnand %p187, %p188
    %p190 = pneg %p189
    // Predicated region
    $region9: #{jasper_final_block.1} parent=5 // pred_check
      _
    $region10: #{jasper_final_block.1} parent=5 // pred_check_branch
      %192 = sbr.rel (%p189) target = $region12
    $region11: #{jasper_final_block.1} parent=5 // pred_region
      %s193 = ssub.s32 %s13, 1
      // Predicated region
      $region13: #{jasper_final_block.1} parent=11 // pred_check
        %p194 = pneg %p46
      $region14: #{jasper_final_block.1} parent=11 // pred_check_branch
        %196 = sbr.rel (%p194) target = $region16
      $region15: #{jasper_final_block.1} parent=11 // pred_region
        _
      $region16: #{jasper_final_block.1} parent=11 // pred_fallthru
        _
      // Predicated region
      $region17: #{jasper_final_block.1} parent=11 // pred_check
        %p197 = pneg %p67
      $region18: #{jasper_final_block.1} parent=11 // pred_check_branch
        %199 = sbr.rel (%p197) target = $region20
      $region19: #{jasper_final_block.1} parent=11 // pred_region
        _
      $region20: #{jasper_final_block.1} parent=11 // pred_fallthru
        _
      // Predicated region
      $region21: #{jasper_final_block.1} parent=11 // pred_check
        %p200 = pneg %p88
      $region22: #{jasper_final_block.1} parent=11 // pred_check_branch
        %202 = sbr.rel (%p200) target = $region24
      $region23: #{jasper_final_block.1} parent=11 // pred_region
        _
      $region24: #{jasper_final_block.1} parent=11 // pred_fallthru
        _
      // Predicated region
      $region25: #{jasper_final_block.1} parent=11 // pred_check
        %p203 = pneg %p109
      $region26: #{jasper_final_block.1} parent=11 // pred_check_branch
        %205 = sbr.rel (%p203) target = $region28
      $region27: #{jasper_final_block.1} parent=11 // pred_region
        _
      $region28: #{jasper_final_block.1} parent=11 // pred_fallthru
        _
      // Predicated region
      $region29: #{jasper_final_block.1} parent=11 // pred_check
        %p206 = pneg %p130
      $region30: #{jasper_final_block.1} parent=11 // pred_check_branch
        %208 = sbr.rel (%p206) target = $region32
      $region31: #{jasper_final_block.1} parent=11 // pred_region
        _
      $region32: #{jasper_final_block.1} parent=11 // pred_fallthru
        _
      // Predicated region
      $region33: #{jasper_final_block.1} parent=11 // pred_check
        %p209 = pneg %p151
      $region34: #{jasper_final_block.1} parent=11 // pred_check_branch
        %211 = sbr.rel (%p209) target = $region36
      $region35: #{jasper_final_block.1} parent=11 // pred_region
        _
      $region36: #{jasper_final_block.1} parent=11 // pred_fallthru
        _
    $region12: #{jasper_final_block.1} parent=5 // pred_fallthru
      _
    %p212 = scmp.lt.s32.totalorder %s13, 4
    // Predicated region
    $region37: #{jasper_final_block.1} parent=5 // pred_check
      %p213 = pneg %p212
    $region38: #{jasper_final_block.1} parent=5 // pred_check_branch
      %215 = sbr.rel (%p213) target = $region40
    $region39: #{jasper_final_block.1} parent=5 // pred_region
      _
    $region40: #{jasper_final_block.1} parent=5 // pred_fallthru
      _
    %p216 = scmp.le.s32.totalorder 1, %s13
    %p217 = scmp.lt.s32.totalorder %s13, 5
    %p218 = pnand %p216, %p217
    %p219 = pneg %p218
    // Predicated region
    $region41: #{jasper_final_block.1} parent=5 // pred_check
      _
    $region42: #{jasper_final_block.1} parent=5 // pred_check_branch
      %221 = sbr.rel (%p218) target = $region44
    $region43: #{jasper_final_block.1} parent=5 // pred_region
      %s222 = ssub.s32 %s13, 1
      %p223 = pneg %p46
      %p224 = pneg %p43
      %p225 = pneg %p67
      %p226 = pneg %p64
      %p227 = pneg %p88
      %p228 = pneg %p85
      %p229 = pneg %p109
      %p230 = pneg %p106
      %p231 = pneg %p130
      %p232 = pneg %p127
      %p233 = pneg %p151
      %p234 = pneg %p148
      %p235 = pneg %p179
      %p236 = pneg %p176
      %p237 = scmp.lt.s32.totalorder %s22, 1
      %s238 = scalar_select %p237, %s22, 1
      %p239 = scmp.lt.s32.totalorder %s23, 1
      %s240 = scalar_select %p239, %s23, 1
      %s241 = smul.addr %s238, 2
      %s242 = sadd.s32 %s240, %s241
      %s243 = smul.addr %s242, 8
      %s244 = scalar_lea.vmem %s7, %s243
      %p245 = scmp.lt.s32.totalorder %s22, 1
      %s246 = scalar_select %p245, %s22, 1
      %p247 = scmp.lt.s32.totalorder %s23, 1
      %s248 = scalar_select %p247, %s23, 1
      %s249 = smul.addr %s246, 2
      %s250 = sadd.s32 %s248, %s249
      %s251 = smul.addr %s250, 8
      %s252 = scalar_lea.vmem %s7, %s251
      %p253 = scmp.eq.s32.totalorder %s23, 0
      // Predicated region
      $region45: #{jasper_final_block.1} parent=43 // pred_check
        %p254 = pneg %p253
      $region46: #{jasper_final_block.1} parent=43 // pred_check_branch
        %256 = sbr.rel (%p254) target = $region48
      $region47: #{jasper_final_block.1} parent=43 // pred_region
        %257 = vst [vmem:[#allocation2] sm:$0xff] 0.0
        %258 = vst [vmem:[#allocation2 + $0x18] sm:$0xff] 0.0
        %s259 = smul.u32 %s22, 16
        %s260 = scalar_lea.vmem %s0, %s259
        %s261 = scalar_lea.vmem [#allocation2], 8
        %p263 = scmp.lt.u32.totalorder 16, 8
        %p264 = pneg %p263
        // Predicated region
        $region49: #{jasper_final_block.1} parent=47 // pred_check
          _
        $region50: #{jasper_final_block.1} parent=47 // pred_check_branch
          %266 = sbr.rel (%p263) target = $region52
        $region51: #{jasper_final_block.1} parent=47 // pred_region
          %s281 = sand.u32 16, 7
          %p282 = scmp.eq.s32.totalorder %s281, 0
          // Predicated region
          $region64: #{jasper_final_block.1} parent=51 // pred_check
            %p283 = pneg %p282
          $region65: #{jasper_final_block.1} parent=51 // pred_check_branch
            %285 = sbr.rel (%p283) target = $region67
          $region66: #{jasper_final_block.1} parent=51 // pred_region
            loop: start=0, step=1, limit=1
            $region68: #{jasper_final_block.1} parent=66 // loop_pre_header
              _
            $region69: #{jasper_final_block.1} parent=66 // loop_header
              %s287 = sphi 0, %s291
              %p288 = scmp.ge.s32.totalorder %s287, 1
              %s292 = sphi %s260, %s260
              %s293 = sphi %s261, %s261
            $region70: #{jasper_final_block.1} parent=66 // loop_header_branch
              %290 = sbr.rel (%p288) target = $region74
            $region71: #{jasper_final_block.1} parent=66 // loop_body
              %v294 = vld [vmem:[%s292] sm:$0xff]
              %295 = vst [vmem:[%s293] sm:$0xff] %v294
              %v296 = vld [vmem:[%s292 + $0x8] sm:$0xff]
              %297 = vst [vmem:[%s293 + $0x8] sm:$0xff] %v296
            $region72: #{jasper_final_block.1} parent=66 // loop_footer
              %s291 = sadd.s32 1, %s287
            $region73: #{jasper_final_block.1} parent=66 // loop_footer_branch
              %286 = sbr.rel target = $region69
            $region74: #{jasper_final_block.1} parent=66 // loop_exit
              _
          $region67: #{jasper_final_block.1} parent=51 // pred_fallthru
            _
          %p298 = pneg %p282
          // Predicated region
          $region75: #{jasper_final_block.1} parent=51 // pred_check
            _
          $region76: #{jasper_final_block.1} parent=51 // pred_check_branch
            %300 = sbr.rel (%p282) target = $region78
          $region77: #{jasper_final_block.1} parent=51 // pred_region
            %s301 = sand.u32 16, 7
          $region78: #{jasper_final_block.1} parent=51 // pred_fallthru
            _
        $region52: #{jasper_final_block.1} parent=47 // pred_fallthru
          _
        // Predicated region
        $region53: #{jasper_final_block.1} parent=47 // pred_check
          %p267 = pneg %p263
        $region54: #{jasper_final_block.1} parent=47 // pred_check_branch
          %269 = sbr.rel (%p267) target = $region56
        $region55: #{jasper_final_block.1} parent=47 // pred_region
          %s270 = sshllo.u32 0, 16
          loop: start=0, step=1, limit=1
          $region57: #{jasper_final_block.1} parent=55 // loop_pre_header
            _
          $region58: #{jasper_final_block.1} parent=55 // loop_header
            %s272 = sphi 0, %s276
            %p273 = scmp.ge.s32.totalorder %s272, 1
            %s277 = sphi %s260, %s260
            %s278 = sphi %s261, %s261
          $region59: #{jasper_final_block.1} parent=55 // loop_header_branch
            %275 = sbr.rel (%p273) target = $region63
          $region60: #{jasper_final_block.1} parent=55 // loop_body
            %v279 = vld [vmem:[%s277] sm:%s270]
            %280 = vst [vmem:[%s278] sm:%s270] %v279
          $region61: #{jasper_final_block.1} parent=55 // loop_footer
            %s276 = sadd.s32 1, %s272
          $region62: #{jasper_final_block.1} parent=55 // loop_footer_branch
            %271 = sbr.rel target = $region58
          $region63: #{jasper_final_block.1} parent=55 // loop_exit
            _
        $region56: #{jasper_final_block.1} parent=47 // pred_fallthru
          _
        // Predicated region
        $region79: #{jasper_final_block.1} parent=47 // pred_check
          _
        $region80: #{jasper_final_block.1} parent=47 // pred_check_branch
          %304 = sbr.rel (0) target = $region82
        $region81: #{jasper_final_block.1} parent=47 // pred_region
          %305 = vsyncadd [#allocation3], 256
        $region82: #{jasper_final_block.1} parent=47 // pred_fallthru
          _
        %s306 = smul.u32 16, 1
        %s307 = sshll.u32 %s306, 4
        %308 = dma.done [#allocation3], %s307
      $region48: #{jasper_final_block.1} parent=43 // pred_fallthru
        _
      %s309 = smul.u32 %s23, 8
      %s310 = ssub.s32 %s309, 1
      %s311 = sadd.s32 %s309, 1
      %s312 = scalar_lea.vmem [#allocation2], %s311
      %v313 = vld [vmem:[%s312 + $0x8] sm:$0xff]
      %v314 = vld [vmem:[%s312 + $0x10] sm:$0x3]
      %s315 = scalar_lea.vmem %s1, 384
      %v316 = vld [vmem:[%s315] sm:$0xff]
      %v317 = vld [vmem:[%s315 + $0x8] sm:$0xff]
      %v318 = vld [vmem:[%s315 + $0x10] sm:$0xff]
      %v319 = vld [vmem:[%s315 + $0x18] sm:$0xff]
      %v320 = vld [vmem:[%s315 + $0x20] sm:$0xff]
      %v321 = vld [vmem:[%s315 + $0x28] sm:$0xff]
      %v322 = vld [vmem:[%s315 + $0x30] sm:$0xff]
      %v323 = vld [vmem:[%s315 + $0x38] sm:$0xff]
      %v324 = vld [vmem:[%s315 + $0x40] sm:$0xff]
      %v325 = vld [vmem:[%s315 + $0x48] sm:$0xff]
      %v326 = vld [vmem:[%s315 + $0x50] sm:$0xff]
      %v327 = vld [vmem:[%s315 + $0x58] sm:$0xff]
      %v328 = vld [vmem:[%s315 + $0x60] sm:$0xff]
      %v329 = vld [vmem:[%s315 + $0x68] sm:$0xff]
      %v330 = vld [vmem:[%s315 + $0x70] sm:$0xff]
      %v331 = vld [vmem:[%s315 + $0x78] sm:$0xff]
      %s332 = sadd.s32 %s309, 3
      %s333 = scalar_lea.vmem [#allocation2], %s332
      %v334 = vld [vmem:[%s333] sm:$0xff]
      %v335 = vld [vmem:[%s333 + $0x8] sm:$0xff]
      %v336 = vld [vmem:[%s333 + $0x10] sm:$0x3]
      %v337 = vld [vmem:[%s1] sm:$0xff]
      %v338 = vld [vmem:[%s1 + $0x8] sm:$0xff]
      %v339 = vld [vmem:[%s1 + $0x10] sm:$0xff]
      %v340 = vld [vmem:[%s1 + $0x18] sm:$0xff]
      %v341 = vld [vmem:[%s1 + $0x20] sm:$0xff]
      %v342 = vld [vmem:[%s1 + $0x28] sm:$0xff]
      %v343 = vld [vmem:[%s1 + $0x30] sm:$0xff]
      %v344 = vld [vmem:[%s1 + $0x38] sm:$0xff]
      %v345 = vld [vmem:[%s1 + $0x40] sm:$0xff]
      %v346 = vld [vmem:[%s1 + $0x48] sm:$0xff]
      %v347 = vld [vmem:[%s1 + $0x50] sm:$0xff]
      %v348 = vld [vmem:[%s1 + $0x58] sm:$0xff]
      %v349 = vld [vmem:[%s1 + $0x60] sm:$0xff]
      %v350 = vld [vmem:[%s1 + $0x68] sm:$0xff]
      %v351 = vld [vmem:[%s1 + $0x70] sm:$0xff]
      %v352 = vld [vmem:[%s1 + $0x78] sm:$0xff]
      %353 = vmatprep.subr.mxu0 0.0
      %354 = vmatpush1.msra.mxu0 %v337
      %355 = vmatprep.subr.mxu0 0.0
      %356 = vmatpush1.msra.mxu0 %v338
      %357 = vmatprep.subr.mxu0 0.0
      %358 = vmatpush1.msra.mxu0 %v339
      %359 = vmatprep.subr.mxu0 0.0
      %360 = vmatpush1.msra.mxu0 %v340
      %361 = vmatprep.subr.mxu0 0.0
      %362 = vmatpush1.msra.mxu0 %v341
      %363 = vmatprep.subr.mxu0 0.0
      %364 = vmatpush1.msra.mxu0 %v342
      %365 = vmatprep.subr.mxu0 0.0
      %366 = vmatpush1.msra.mxu0 %v343
      %367 = vmatprep.subr.mxu0 0.0
      %368 = vmatpush1.msra.mxu0 %v344
      %369 = vmatprep.subr.mxu0 0.0
      %370 = vmatpush1.msra.mxu0 %v345
      %371 = vmatprep.subr.mxu0 0.0
      %372 = vmatpush1.msra.mxu0 %v346
      %373 = vmatprep.subr.mxu0 0.0
      %374 = vmatpush1.msra.mxu0 %v347
      %375 = vmatprep.subr.mxu0 0.0
      %376 = vmatpush1.msra.mxu0 %v348
      %377 = vmatprep.subr.mxu0 0.0
      %378 = vmatpush1.msra.mxu0 %v349
      %379 = vmatprep.subr.mxu0 0.0
      %380 = vmatpush1.msra.mxu0 %v350
      %381 = vmatprep.subr.mxu0 0.0
      %382 = vmatpush1.msra.mxu0 %v351
      %383 = vmatprep.subr.mxu0 0.0
      %384 = vmatpush1.msra.mxu0 %v352
      %385 = vmatprep.subr.mxu0 0.0
      %386 = vmatpush1.msra.mxu0 0.0
      %387 = vmatprep.subr.mxu0 0.0
      %388 = vmatpush1.msra.mxu0 0.0
      %389 = vmatprep.subr.mxu0 0.0
      %390 = vmatpush1.msra.mxu0 0.0
      %391 = vmatprep.subr.mxu0 0.0
      %392 = vmatpush1.msra.mxu0 0.0
      %393 = vmatprep.subr.mxu0 0.0
      %394 = vmatpush1.msra.mxu0 0.0
      %395 = vmatprep.subr.mxu0 0.0
      %396 = vmatpush1.msra.mxu0 0.0
      %397 = vmatprep.subr.mxu0 0.0
      %398 = vmatpush1.msra.mxu0 0.0
      %399 = vmatprep.subr.mxu0 0.0
      %400 = vmatpush1.msra.mxu0 0.0
      %401 = vmatprep.subr.mxu0 0.0
      %402 = vmatpush1.msra.mxu0 0.0
      %403 = vmatprep.subr.mxu0 0.0
      %404 = vmatpush1.msra.mxu0 0.0
      %405 = vmatprep.subr.mxu0 0.0
      %406 = vmatpush1.msra.mxu0 0.0
      %407 = vmatprep.subr.mxu0 0.0
      %408 = vmatpush1.msra.mxu0 0.0
      %409 = vmatprep.subr.mxu0 0.0
      %410 = vmatpush1.msra.mxu0 0.0
      %411 = vmatprep.subr.mxu0 0.0
      %412 = vmatpush1.msra.mxu0 0.0
      %413 = vmatprep.subr.mxu0 0.0
      %414 = vmatpush1.msra.mxu0 0.0
      %415 = vmatprep.subr.mxu0 0.0
      %416 = vmatpush1.msra.mxu0 0.0
      %417 = vmatprep.mubr.f32.mxu0 0.0
      %418 = vmatmul.mubr.f32.gmra.mrb[0].mxu0 %v334
      %v419 = vpop.f32.mrb[0].mxu0
      %v420 = vadd.f32 0.0, %v419
      %v421 = vpop.f32.mrb[0].mxu0
      %422 = vmatprep.mubr.f32.mxu0 0.0
      %423 = vmatmul.mubr.f32.gmra.mrb[0].mxu0 %v335
      %v424 = vpop.f32.mrb[0].mxu0
      %v425 = vadd.f32 0.0, %v424
      %v426 = vpop.f32.mrb[0].mxu0
      %427 = vdwg.mxu0
      %428 = vmatprep.subr.mxu0 0.0
      %429 = vmatpush1.msra.mxu0 %v316
      %430 = vmatprep.subr.mxu0 0.0
      %431 = vmatpush1.msra.mxu0 %v317
      %432 = vmatprep.subr.mxu0 0.0
      %433 = vmatpush1.msra.mxu0 %v318
      %434 = vmatprep.subr.mxu0 0.0
      %435 = vmatpush1.msra.mxu0 %v319
      %436 = vmatprep.subr.mxu0 0.0
      %437 = vmatpush1.msra.mxu0 %v320
      %438 = vmatprep.subr.mxu0 0.0
      %439 = vmatpush1.msra.mxu0 %v321
      %440 = vmatprep.subr.mxu0 0.0
      %441 = vmatpush1.msra.mxu0 %v322
      %442 = vmatprep.subr.mxu0 0.0
      %443 = vmatpush1.msra.mxu0 %v323
      %444 = vmatprep.subr.mxu0 0.0
      %445 = vmatpush1.msra.mxu0 %v324
      %446 = vmatprep.subr.mxu0 0.0
      %447 = vmatpush1.msra.mxu0 %v325
      %448 = vmatprep.subr.mxu0 0.0
      %449 = vmatpush1.msra.mxu0 %v326
      %450 = vmatprep.subr.mxu0 0.0
      %451 = vmatpush1.msra.mxu0 %v327
      %452 = vmatprep.subr.mxu0 0.0
      %453 = vmatpush1.msra.mxu0 %v328
      %454 = vmatprep.subr.mxu0 0.0
      %455 = vmatpush1.msra.mxu0 %v329
      %456 = vmatprep.subr.mxu0 0.0
      %457 = vmatpush1.msra.mxu0 %v330
      %458 = vmatprep.subr.mxu0 0.0
      %459 = vmatpush1.msra.mxu0 %v331
      %460 = vmatprep.subr.mxu0 0.0
      %461 = vmatpush1.msra.mxu0 0.0
      %462 = vmatprep.subr.mxu0 0.0
      %463 = vmatpush1.msra.mxu0 0.0
      %464 = vmatprep.subr.mxu0 0.0
      %465 = vmatpush1.msra.mxu0 0.0
      %466 = vmatprep.subr.mxu0 0.0
      %467 = vmatpush1.msra.mxu0 0.0
      %468 = vmatprep.subr.mxu0 0.0
      %469 = vmatpush1.msra.mxu0 0.0
      %470 = vmatprep.subr.mxu0 0.0
      %471 = vmatpush1.msra.mxu0 0.0
      %472 = vmatprep.subr.mxu0 0.0
      %473 = vmatpush1.msra.mxu0 0.0
      %474 = vmatprep.subr.mxu0 0.0
      %475 = vmatpush1.msra.mxu0 0.0
      %476 = vmatprep.subr.mxu0 0.0
      %477 = vmatpush1.msra.mxu0 0.0
      %478 = vmatprep.subr.mxu0 0.0
      %479 = vmatpush1.msra.mxu0 0.0
      %480 = vmatprep.subr.mxu0 0.0
      %481 = vmatpush1.msra.mxu0 0.0
      %482 = vmatprep.subr.mxu0 0.0
      %483 = vmatpush1.msra.mxu0 0.0
      %484 = vmatprep.subr.mxu0 0.0
      %485 = vmatpush1.msra.mxu0 0.0
      %486 = vmatprep.subr.mxu0 0.0
      %487 = vmatpush1.msra.mxu0 0.0
      %488 = vmatprep.subr.mxu0 0.0
      %489 = vmatpush1.msra.mxu0 0.0
      %490 = vmatprep.subr.mxu0 0.0
      %491 = vmatpush1.msra.mxu0 0.0
      %492 = vmatprep.mubr.f32.mxu0 0.0
      %493 = vmatmul.mubr.f32.gmra.mrb[0].mxu0 %v313
      %v494 = vpop.f32.mrb[0].mxu0
      %v495 = vadd.f32 %v420, %v494
      %v496 = vpop.f32.mrb[0].mxu0
      %497 = vmatprep.mubr.f32.mxu0 0.0
      %498 = vmatmul.mubr.f32.gmra.mrb[0].mxu0 %v314
      %v499 = vpop.f32.mrb[0].mxu0
      %v500 = vadd.f32 %v425, %v499
      %v501 = vpop.f32.mrb[0].mxu0
      %502 = vdwg.mxu0
      %s503 = scalar_lea.vmem %s1, 512
      %v504 = vld [vmem:[%s503] sm:$0xff]
      %v505 = vld [vmem:[%s503 + $0x8] sm:$0xff]
      %v506 = vld [vmem:[%s503 + $0x10] sm:$0xff]
      %v507 = vld [vmem:[%s503 + $0x18] sm:$0xff]
      %v508 = vld [vmem:[%s503 + $0x20] sm:$0xff]
      %v509 = vld [vmem:[%s503 + $0x28] sm:$0xff]
      %v510 = vld [vmem:[%s503 + $0x30] sm:$0xff]
      %v511 = vld [vmem:[%s503 + $0x38] sm:$0xff]
      %v512 = vld [vmem:[%s503 + $0x40] sm:$0xff]
      %v513 = vld [vmem:[%s503 + $0x48] sm:$0xff]
      %v514 = vld [vmem:[%s503 + $0x50] sm:$0xff]
      %v515 = vld [vmem:[%s503 + $0x58] sm:$0xff]
      %v516 = vld [vmem:[%s503 + $0x60] sm:$0xff]
      %v517 = vld [vmem:[%s503 + $0x68] sm:$0xff]
      %v518 = vld [vmem:[%s503 + $0x70] sm:$0xff]
      %v519 = vld [vmem:[%s503 + $0x78] sm:$0xff]
      %520 = vmatprep.subr.mxu0 0.0
      %521 = vmatpush1.msra.mxu0 %v504
      %522 = vmatprep.subr.mxu0 0.0
      %523 = vmatpush1.msra.mxu0 %v505
      %524 = vmatprep.subr.mxu0 0.0
      %525 = vmatpush1.msra.mxu0 %v506
      %526 = vmatprep.subr.mxu0 0.0
      %527 = vmatpush1.msra.mxu0 %v507
      %528 = vmatprep.subr.mxu0 0.0
      %529 = vmatpush1.msra.mxu0 %v508
      %530 = vmatprep.subr.mxu0 0.0
      %531 = vmatpush1.msra.mxu0 %v509
      %532 = vmatprep.subr.mxu0 0.0
      %533 = vmatpush1.msra.mxu0 %v510
      %534 = vmatprep.subr.mxu0 0.0
      %535 = vmatpush1.msra.mxu0 %v511
      %536 = vmatprep.subr.mxu0 0.0
      %537 = vmatpush1.msra.mxu0 %v512
      %538 = vmatprep.subr.mxu0 0.0
      %539 = vmatpush1.msra.mxu0 %v513
      %540 = vmatprep.subr.mxu0 0.0
      %541 = vmatpush1.msra.mxu0 %v514
      %542 = vmatprep.subr.mxu0 0.0
      %543 = vmatpush1.msra.mxu0 %v515
      %544 = vmatprep.subr.mxu0 0.0
      %545 = vmatpush1.msra.mxu0 %v516
      %546 = vmatprep.subr.mxu0 0.0
      %547 = vmatpush1.msra.mxu0 %v517
      %548 = vmatprep.subr.mxu0 0.0
      %549 = vmatpush1.msra.mxu0 %v518
      %550 = vmatprep.subr.mxu0 0.0
      %551 = vmatpush1.msra.mxu0 %v519
      %552 = vmatprep.subr.mxu0 0.0
      %553 = vmatpush1.msra.mxu0 0.0
      %554 = vmatprep.subr.mxu0 0.0
      %555 = vmatpush1.msra.mxu0 0.0
      %556 = vmatprep.subr.mxu0 0.0
      %557 = vmatpush1.msra.mxu0 0.0
      %558 = vmatprep.subr.mxu0 0.0
      %559 = vmatpush1.msra.mxu0 0.0
      %560 = vmatprep.subr.mxu0 0.0
      %561 = vmatpush1.msra.mxu0 0.0
      %562 = vmatprep.subr.mxu0 0.0
      %563 = vmatpush1.msra.mxu0 0.0
      %564 = vmatprep.subr.mxu0 0.0
      %565 = vmatpush1.msra.mxu0 0.0
      %566 = vmatprep.subr.mxu0 0.0
      %567 = vmatpush1.msra.mxu0 0.0
      %568 = vmatprep.subr.mxu0 0.0
      %569 = vmatpush1.msra.mxu0 0.0
      %570 = vmatprep.subr.mxu0 0.0
      %571 = vmatpush1.msra.mxu0 0.0
      %572 = vmatprep.subr.mxu0 0.0
      %573 = vmatpush1.msra.mxu0 0.0
      %574 = vmatprep.subr.mxu0 0.0
      %575 = vmatpush1.msra.mxu0 0.0
      %576 = vmatprep.subr.mxu0 0.0
      %577 = vmatpush1.msra.mxu0 0.0
      %578 = vmatprep.subr.mxu0 0.0
      %579 = vmatpush1.msra.mxu0 0.0
      %580 = vmatprep.subr.mxu0 0.0
      %581 = vmatpush1.msra.mxu0 0.0
      %582 = vmatprep.subr.mxu0 0.0
      %583 = vmatpush1.msra.mxu0 0.0
      %584 = vmatprep.mubr.f32.mxu0 0.0
      %585 = vmatmul.mubr.f32.gmra.mrb[0].mxu0 %v335
      %v586 = vpop.f32.mrb[0].mxu0
      %v587 = vadd.f32 0.0, %v586
      %v588 = vpop.f32.mrb[0].mxu0
      %589 = vmatprep.mubr.f32.mxu0 0.0
      %590 = vmatmul.mubr.f32.gmra.mrb[0].mxu0 %v336
      %v591 = vpop.f32.mrb[0].mxu0
      %v592 = vadd.f32 0.0, %v591
      %v593 = vpop.f32.mrb[0].mxu0
      %594 = vdwg.mxu0
      %v595 = vadd.f32 %v495, %v587
      %v596 = vadd.f32 %v500, %v592
      %s597 = sadd.s32 %s309, 5
      %s598 = scalar_lea.vmem [#allocation2], %s597
      %v599 = vld [vmem:[%s598] sm:$0xff]
      %v600 = vld [vmem:[%s598 + $0x8] sm:$0x3]
      %s601 = scalar_lea.vmem %s1, 128
      %v602 = vld [vmem:[%s601] sm:$0xff]
      %v603 = vld [vmem:[%s601 + $0x8] sm:$0xff]
      %v604 = vld [vmem:[%s601 + $0x10] sm:$0xff]
      %v605 = vld [vmem:[%s601 + $0x18] sm:$0xff]
      %v606 = vld [vmem:[%s601 + $0x20] sm:$0xff]
      %v607 = vld [vmem:[%s601 + $0x28] sm:$0xff]
      %v608 = vld [vmem:[%s601 + $0x30] sm:$0xff]
      %v609 = vld [vmem:[%s601 + $0x38] sm:$0xff]
      %v610 = vld [vmem:[%s601 + $0x40] sm:$0xff]
      %v611 = vld [vmem:[%s601 + $0x48] sm:$0xff]
      %v612 = vld [vmem:[%s601 + $0x50] sm:$0xff]
      %v613 = vld [vmem:[%s601 + $0x58] sm:$0xff]
      %v614 = vld [vmem:[%s601 + $0x60] sm:$0xff]
      %v615 = vld [vmem:[%s601 + $0x68] sm:$0xff]
      %v616 = vld [vmem:[%s601 + $0x70] sm:$0xff]
      %v617 = vld [vmem:[%s601 + $0x78] sm:$0xff]
      %618 = vmatprep.subr.mxu0 0.0
      %619 = vmatpush1.msra.mxu0 %v602
      %620 = vmatprep.subr.mxu0 0.0
      %621 = vmatpush1.msra.mxu0 %v603
      %622 = vmatprep.subr.mxu0 0.0
      %623 = vmatpush1.msra.mxu0 %v604
      %624 = vmatprep.subr.mxu0 0.0
      %625 = vmatpush1.msra.mxu0 %v605
      %626 = vmatprep.subr.mxu0 0.0
      %627 = vmatpush1.msra.mxu0 %v606
      %628 = vmatprep.subr.mxu0 0.0
      %629 = vmatpush1.msra.mxu0 %v607
      %630 = vmatprep.subr.mxu0 0.0
      %631 = vmatpush1.msra.mxu0 %v608
      %632 = vmatprep.subr.mxu0 0.0
      %633 = vmatpush1.msra.mxu0 %v609
      %634 = vmatprep.subr.mxu0 0.0
      %635 = vmatpush1.msra.mxu0 %v610
      %636 = vmatprep.subr.mxu0 0.0
      %637 = vmatpush1.msra.mxu0 %v611
      %638 = vmatprep.subr.mxu0 0.0
      %639 = vmatpush1.msra.mxu0 %v612
      %640 = vmatprep.subr.mxu0 0.0
      %641 = vmatpush1.msra.mxu0 %v613
      %642 = vmatprep.subr.mxu0 0.0
      %643 = vmatpush1.msra.mxu0 %v614
      %644 = vmatprep.subr.mxu0 0.0
      %645 = vmatpush1.msra.mxu0 %v615
      %646 = vmatprep.subr.mxu0 0.0
      %647 = vmatpush1.msra.mxu0 %v616
      %648 = vmatprep.subr.mxu0 0.0
      %649 = vmatpush1.msra.mxu0 %v617
      %650 = vmatprep.subr.mxu0 0.0
      %651 = vmatpush1.msra.mxu0 0.0
      %652 = vmatprep.subr.mxu0 0.0
      %653 = vmatpush1.msra.mxu0 0.0
      %654 = vmatprep.subr.mxu0 0.0
      %655 = vmatpush1.msra.mxu0 0.0
      %656 = vmatprep.subr.mxu0 0.0
      %657 = vmatpush1.msra.mxu0 0.0
      %658 = vmatprep.subr.mxu0 0.0
      %659 = vmatpush1.msra.mxu0 0.0
      %660 = vmatprep.subr.mxu0 0.0
      %661 = vmatpush1.msra.mxu0 0.0
      %662 = vmatprep.subr.mxu0 0.0
      %663 = vmatpush1.msra.mxu0 0.0
      %664 = vmatprep.subr.mxu0 0.0
      %665 = vmatpush1.msra.mxu0 0.0
      %666 = vmatprep.subr.mxu0 0.0
      %667 = vmatpush1.msra.mxu0 0.0
      %668 = vmatprep.subr.mxu0 0.0
      %669 = vmatpush1.msra.mxu0 0.0
      %670 = vmatprep.subr.mxu0 0.0
      %671 = vmatpush1.msra.mxu0 0.0
      %672 = vmatprep.subr.mxu0 0.0
      %673 = vmatpush1.msra.mxu0 0.0
      %674 = vmatprep.subr.mxu0 0.0
      %675 = vmatpush1.msra.mxu0 0.0
      %676 = vmatprep.subr.mxu0 0.0
      %677 = vmatpush1.msra.mxu0 0.0
      %678 = vmatprep.subr.mxu0 0.0
      %679 = vmatpush1.msra.mxu0 0.0
      %680 = vmatprep.subr.mxu0 0.0
      %681 = vmatpush1.msra.mxu0 0.0
      %682 = vmatprep.mubr.f32.mxu0 0.0
      %683 = vmatmul.mubr.f32.gmra.mrb[0].mxu0 %v599
      %v684 = vpop.f32.mrb[0].mxu0
      %v685 = vadd.f32 0.0, %v684
      %v686 = vpop.f32.mrb[0].mxu0
      %687 = vmatprep.mubr.f32.mxu0 0.0
      %688 = vmatmul.mubr.f32.gmra.mrb[0].mxu0 %v600
      %v689 = vpop.f32.mrb[0].mxu0
      %v690 = vadd.f32 0.0, %v689
      %v691 = vpop.f32.mrb[0].mxu0
      %692 = vdwg.mxu0
      %v693 = vadd.f32 %v595, %v685
      %v694 = vadd.f32 %v596, %v690
      %s695 = sadd.s32 %s309, 7
      %s696 = scalar_lea.vmem [#allocation2], %s695
      %v697 = vld [vmem:[%s696] sm:$0xff]
      %v698 = vld [vmem:[%s696 + $0x8] sm:$0x3]
      %s699 = scalar_lea.vmem %s1, 256
      %v700 = vld [vmem:[%s699] sm:$0xff]
      %v701 = vld [vmem:[%s699 + $0x8] sm:$0xff]
      %v702 = vld [vmem:[%s699 + $0x10] sm:$0xff]
      %v703 = vld [vmem:[%s699 + $0x18] sm:$0xff]
      %v704 = vld [vmem:[%s699 + $0x20] sm:$0xff]
      %v705 = vld [vmem:[%s699 + $0x28] sm:$0xff]
      %v706 = vld [vmem:[%s699 + $0x30] sm:$0xff]
      %v707 = vld [vmem:[%s699 + $0x38] sm:$0xff]
      %v708 = vld [vmem:[%s699 + $0x40] sm:$0xff]
      %v709 = vld [vmem:[%s699 + $0x48] sm:$0xff]
      %v710 = vld [vmem:[%s699 + $0x50] sm:$0xff]
      %v711 = vld [vmem:[%s699 + $0x58] sm:$0xff]
      %v712 = vld [vmem:[%s699 + $0x60] sm:$0xff]
      %v713 = vld [vmem:[%s699 + $0x68] sm:$0xff]
      %v714 = vld [vmem:[%s699 + $0x70] sm:$0xff]
      %v715 = vld [vmem:[%s699 + $0x78] sm:$0xff]
      %716 = vmatprep.subr.mxu0 0.0
      %717 = vmatpush1.msra.mxu0 %v700
      %718 = vmatprep.subr.mxu0 0.0
      %719 = vmatpush1.msra.mxu0 %v701
      %720 = vmatprep.subr.mxu0 0.0
      %721 = vmatpush1.msra.mxu0 %v702
      %722 = vmatprep.subr.mxu0 0.0
      %723 = vmatpush1.msra.mxu0 %v703
      %724 = vmatprep.subr.mxu0 0.0
      %725 = vmatpush1.msra.mxu0 %v704
      %726 = vmatprep.subr.mxu0 0.0
      %727 = vmatpush1.msra.mxu0 %v705
      %728 = vmatprep.subr.mxu0 0.0
      %729 = vmatpush1.msra.mxu0 %v706
      %730 = vmatprep.subr.mxu0 0.0
      %731 = vmatpush1.msra.mxu0 %v707
      %732 = vmatprep.subr.mxu0 0.0
      %733 = vmatpush1.msra.mxu0 %v708
      %734 = vmatprep.subr.mxu0 0.0
      %735 = vmatpush1.msra.mxu0 %v709
      %736 = vmatprep.subr.mxu0 0.0
      %737 = vmatpush1.msra.mxu0 %v710
      %738 = vmatprep.subr.mxu0 0.0
      %739 = vmatpush1.msra.mxu0 %v711
      %740 = vmatprep.subr.mxu0 0.0
      %741 = vmatpush1.msra.mxu0 %v712
      %742 = vmatprep.subr.mxu0 0.0
      %743 = vmatpush1.msra.mxu0 %v713
      %744 = vmatprep.subr.mxu0 0.0
      %745 = vmatpush1.msra.mxu0 %v714
      %746 = vmatprep.subr.mxu0 0.0
      %747 = vmatpush1.msra.mxu0 %v715
      %748 = vmatprep.subr.mxu0 0.0
      %749 = vmatpush1.msra.mxu0 0.0
      %750 = vmatprep.subr.mxu0 0.0
      %751 = vmatpush1.msra.mxu0 0.0
      %752 = vmatprep.subr.mxu0 0.0
      %753 = vmatpush1.msra.mxu0 0.0
      %754 = vmatprep.subr.mxu0 0.0
      %755 = vmatpush1.msra.mxu0 0.0
      %756 = vmatprep.subr.mxu0 0.0
      %757 = vmatpush1.msra.mxu0 0.0
      %758 = vmatprep.subr.mxu0 0.0
      %759 = vmatpush1.msra.mxu0 0.0
      %760 = vmatprep.subr.mxu0 0.0
      %761 = vmatpush1.msra.mxu0 0.0
      %762 = vmatprep.subr.mxu0 0.0
      %763 = vmatpush1.msra.mxu0 0.0
      %764 = vmatprep.subr.mxu0 0.0
      %765 = vmatpush1.msra.mxu0 0.0
      %766 = vmatprep.subr.mxu0 0.0
      %767 = vmatpush1.msra.mxu0 0.0
      %768 = vmatprep.subr.mxu0 0.0
      %769 = vmatpush1.msra.mxu0 0.0
      %770 = vmatprep.subr.mxu0 0.0
      %771 = vmatpush1.msra.mxu0 0.0
      %772 = vmatprep.subr.mxu0 0.0
      %773 = vmatpush1.msra.mxu0 0.0
      %774 = vmatprep.subr.mxu0 0.0
      %775 = vmatpush1.msra.mxu0 0.0
      %776 = vmatprep.subr.mxu0 0.0
      %777 = vmatpush1.msra.mxu0 0.0
      %778 = vmatprep.subr.mxu0 0.0
      %779 = vmatpush1.msra.mxu0 0.0
      %780 = vmatprep.mubr.f32.mxu0 0.0
      %781 = vmatmul.mubr.f32.gmra.mrb[0].mxu0 %v697
      %v782 = vpop.f32.mrb[0].mxu0
      %v783 = vadd.f32 0.0, %v782
      %v784 = vpop.f32.mrb[0].mxu0
      %785 = vmatprep.mubr.f32.mxu0 0.0
      %786 = vmatmul.mubr.f32.gmra.mrb[0].mxu0 %v698
      %v787 = vpop.f32.mrb[0].mxu0
      %v788 = vadd.f32 0.0, %v787
      %v789 = vpop.f32.mrb[0].mxu0
      %790 = vdwg.mxu0
      %v791 = vadd.f32 %v693, %v783
      %v792 = vadd.f32 %v694, %v788
      %v793 = vld [vmem:[%s2] sm:$0x1]
      %v795 = vlaneseq
      %v796 = vshrl.u32 %v795, 7
      %v797 = vsub.s32 0, %v796
      %v798 = vrot.slane %v793, %v797
      %v800 = vmul.f32 %v791, %v798
      %v801 = vmul.f32 %v792, %v798
      %v802 = vld [vmem:[%s3] sm:$0x1]
      %v804 = vlaneseq
      %v805 = vshrl.u32 %v804, 7
      %v806 = vsub.s32 0, %v805
      %v807 = vrot.slane %v802, %v806
      %v809 = vadd.f32 %v800, %v807
      %v810 = vadd.f32 %v801, %v807
      %v811 = vmax.f32 %v809, 0.0
      %v812 = vmax.f32 %v810, 0.0
      %v813 = vlaneseq
      %v814 = vshrl.u32 %v813, 7
      %v815 = vadd.s32 %v814, 8
      %v816 = vstv %s310
      %v817 = vadd.s32 %v814, %v816
      %v818 = vadd.s32 %v815, %v816
      %vm819 = vcmp.ge.s32.totalorder %v817, 0
      %vm820 = vcmp.ge.s32.totalorder %v818, 0
      %vm821 = vcmp.lt.s32.totalorder %v817, 16
      %vm822 = vcmp.lt.s32.totalorder %v818, 16
      %vm823 = vmand %vm819, %vm821
      %vm824 = vmand %vm820, %vm822
      %v825 = vsel %vm823, %v811, 0.0
      %v826 = vsel %vm824, %v812, 0.0
      %v827 = vld [vmem:[%s4] sm:$0xff]
      %v828 = vld [vmem:[%s4 + $0x8] sm:$0xff]
      %v829 = vld [vmem:[%s4 + $0x10] sm:$0xff]
      %v830 = vld [vmem:[%s4 + $0x18] sm:$0xff]
      %v831 = vld [vmem:[%s4 + $0x20] sm:$0xff]
      %v832 = vld [vmem:[%s4 + $0x28] sm:$0xff]
      %v833 = vld [vmem:[%s4 + $0x30] sm:$0xff]
      %v834 = vld [vmem:[%s4 + $0x38] sm:$0xff]
      %v835 = vld [vmem:[%s4 + $0x40] sm:$0xff]
      %v836 = vld [vmem:[%s4 + $0x48] sm:$0xff]
      %v837 = vld [vmem:[%s4 + $0x50] sm:$0xff]
      %v838 = vld [vmem:[%s4 + $0x58] sm:$0xff]
      %v839 = vld [vmem:[%s4 + $0x60] sm:$0xff]
      %v840 = vld [vmem:[%s4 + $0x68] sm:$0xff]
      %v841 = vld [vmem:[%s4 + $0x70] sm:$0xff]
      %v842 = vld [vmem:[%s4 + $0x78] sm:$0xff]
      %s843 = scalar_lea.vmem %s4, 128
      %v844 = vld [vmem:[%s843] sm:$0xff]
      %v845 = vld [vmem:[%s843 + $0x8] sm:$0xff]
      %v846 = vld [vmem:[%s843 + $0x10] sm:$0xff]
      %v847 = vld [vmem:[%s843 + $0x18] sm:$0xff]
      %v848 = vld [vmem:[%s843 + $0x20] sm:$0xff]
      %v849 = vld [vmem:[%s843 + $0x28] sm:$0xff]
      %v850 = vld [vmem:[%s843 + $0x30] sm:$0xff]
      %v851 = vld [vmem:[%s843 + $0x38] sm:$0xff]
      %v852 = vld [vmem:[%s843 + $0x40] sm:$0xff]
      %v853 = vld [vmem:[%s843 + $0x48] sm:$0xff]
      %v854 = vld [vmem:[%s843 + $0x50] sm:$0xff]
      %v855 = vld [vmem:[%s843 + $0x58] sm:$0xff]
      %v856 = vld [vmem:[%s843 + $0x60] sm:$0xff]
      %v857 = vld [vmem:[%s843 + $0x68] sm:$0xff]
      %v858 = vld [vmem:[%s843 + $0x70] sm:$0xff]
      %v859 = vld [vmem:[%s843 + $0x78] sm:$0xff]
      %vm862 = vcmask 1046528
      %v863 = vrot.slane %v825, 1
      %v864 = vrot.slane %v826, 1
      %v865 = vsel %vm862, %v863, %v864
      %867 = vmatprep.subr.mxu0 0.0
      %868 = vmatpush1.msra.mxu0 %v844
      %869 = vmatprep.subr.mxu0 0.0
      %870 = vmatpush1.msra.mxu0 %v845
      %871 = vmatprep.subr.mxu0 0.0
      %872 = vmatpush1.msra.mxu0 %v846
      %873 = vmatprep.subr.mxu0 0.0
      %874 = vmatpush1.msra.mxu0 %v847
      %875 = vmatprep.subr.mxu0 0.0
      %876 = vmatpush1.msra.mxu0 %v848
      %877 = vmatprep.subr.mxu0 0.0
      %878 = vmatpush1.msra.mxu0 %v849
      %879 = vmatprep.subr.mxu0 0.0
      %880 = vmatpush1.msra.mxu0 %v850
      %881 = vmatprep.subr.mxu0 0.0
      %882 = vmatpush1.msra.mxu0 %v851
      %883 = vmatprep.subr.mxu0 0.0
      %884 = vmatpush1.msra.mxu0 %v852
      %885 = vmatprep.subr.mxu0 0.0
      %886 = vmatpush1.msra.mxu0 %v853
      %887 = vmatprep.subr.mxu0 0.0
      %888 = vmatpush1.msra.mxu0 %v854
      %889 = vmatprep.subr.mxu0 0.0
      %890 = vmatpush1.msra.mxu0 %v855
      %891 = vmatprep.subr.mxu0 0.0
      %892 = vmatpush1.msra.mxu0 %v856
      %893 = vmatprep.subr.mxu0 0.0
      %894 = vmatpush1.msra.mxu0 %v857
      %895 = vmatprep.subr.mxu0 0.0
      %896 = vmatpush1.msra.mxu0 %v858
      %897 = vmatprep.subr.mxu0 0.0
      %898 = vmatpush1.msra.mxu0 %v859
      %899 = vmatprep.subr.mxu0 0.0
      %900 = vmatpush1.msra.mxu0 0.0
      %901 = vmatprep.subr.mxu0 0.0
      %902 = vmatpush1.msra.mxu0 0.0
      %903 = vmatprep.subr.mxu0 0.0
      %904 = vmatpush1.msra.mxu0 0.0
      %905 = vmatprep.subr.mxu0 0.0
      %906 = vmatpush1.msra.mxu0 0.0
      %907 = vmatprep.subr.mxu0 0.0
      %908 = vmatpush1.msra.mxu0 0.0
      %909 = vmatprep.subr.mxu0 0.0
      %910 = vmatpush1.msra.mxu0 0.0
      %911 = vmatprep.subr.mxu0 0.0
      %912 = vmatpush1.msra.mxu0 0.0
      %913 = vmatprep.subr.mxu0 0.0
      %914 = vmatpush1.msra.mxu0 0.0
      %915 = vmatprep.subr.mxu0 0.0
      %916 = vmatpush1.msra.mxu0 0.0
      %917 = vmatprep.subr.mxu0 0.0
      %918 = vmatpush1.msra.mxu0 0.0
      %919 = vmatprep.subr.mxu0 0.0
      %920 = vmatpush1.msra.mxu0 0.0
      %921 = vmatprep.subr.mxu0 0.0
      %922 = vmatpush1.msra.mxu0 0.0
      %923 = vmatprep.subr.mxu0 0.0
      %924 = vmatpush1.msra.mxu0 0.0
      %925 = vmatprep.subr.mxu0 0.0
      %926 = vmatpush1.msra.mxu0 0.0
      %927 = vmatprep.subr.mxu0 0.0
      %928 = vmatpush1.msra.mxu0 0.0
      %929 = vmatprep.subr.mxu0 0.0
      %930 = vmatpush1.msra.mxu0 0.0
      %931 = vmatprep.mubr.f32.mxu0 0.0
      %932 = vmatmul.mubr.f32.gmra.mrb[0].mxu0 %v865
      %v933 = vpop.f32.mrb[0].mxu0
      %v934 = vadd.f32 0.0, %v933
      %v935 = vpop.f32.mrb[0].mxu0
      %936 = vdwg.mxu0
      %937 = vmatprep.subr.mxu0 0.0
      %938 = vmatpush1.msra.mxu0 %v827
      %939 = vmatprep.subr.mxu0 0.0
      %940 = vmatpush1.msra.mxu0 %v828
      %941 = vmatprep.subr.mxu0 0.0
      %942 = vmatpush1.msra.mxu0 %v829
      %943 = vmatprep.subr.mxu0 0.0
      %944 = vmatpush1.msra.mxu0 %v830
      %945 = vmatprep.subr.mxu0 0.0
      %946 = vmatpush1.msra.mxu0 %v831
      %947 = vmatprep.subr.mxu0 0.0
      %948 = vmatpush1.msra.mxu0 %v832
      %949 = vmatprep.subr.mxu0 0.0
      %950 = vmatpush1.msra.mxu0 %v833
      %951 = vmatprep.subr.mxu0 0.0
      %952 = vmatpush1.msra.mxu0 %v834
      %953 = vmatprep.subr.mxu0 0.0
      %954 = vmatpush1.msra.mxu0 %v835
      %955 = vmatprep.subr.mxu0 0.0
      %956 = vmatpush1.msra.mxu0 %v836
      %957 = vmatprep.subr.mxu0 0.0
      %958 = vmatpush1.msra.mxu0 %v837
      %959 = vmatprep.subr.mxu0 0.0
      %960 = vmatpush1.msra.mxu0 %v838
      %961 = vmatprep.subr.mxu0 0.0
      %962 = vmatpush1.msra.mxu0 %v839
      %963 = vmatprep.subr.mxu0 0.0
      %964 = vmatpush1.msra.mxu0 %v840
      %965 = vmatprep.subr.mxu0 0.0
      %966 = vmatpush1.msra.mxu0 %v841
      %967 = vmatprep.subr.mxu0 0.0
      %968 = vmatpush1.msra.mxu0 %v842
      %969 = vmatprep.subr.mxu0 0.0
      %970 = vmatpush1.msra.mxu0 0.0
      %971 = vmatprep.subr.mxu0 0.0
      %972 = vmatpush1.msra.mxu0 0.0
      %973 = vmatprep.subr.mxu0 0.0
      %974 = vmatpush1.msra.mxu0 0.0
      %975 = vmatprep.subr.mxu0 0.0
      %976 = vmatpush1.msra.mxu0 0.0
      %977 = vmatprep.subr.mxu0 0.0
      %978 = vmatpush1.msra.mxu0 0.0
      %979 = vmatprep.subr.mxu0 0.0
      %980 = vmatpush1.msra.mxu0 0.0
      %981 = vmatprep.subr.mxu0 0.0
      %982 = vmatpush1.msra.mxu0 0.0
      %983 = vmatprep.subr.mxu0 0.0
      %984 = vmatpush1.msra.mxu0 0.0
      %985 = vmatprep.subr.mxu0 0.0
      %986 = vmatpush1.msra.mxu0 0.0
      %987 = vmatprep.subr.mxu0 0.0
      %988 = vmatpush1.msra.mxu0 0.0
      %989 = vmatprep.subr.mxu0 0.0
      %990 = vmatpush1.msra.mxu0 0.0
      %991 = vmatprep.subr.mxu0 0.0
      %992 = vmatpush1.msra.mxu0 0.0
      %993 = vmatprep.subr.mxu0 0.0
      %994 = vmatpush1.msra.mxu0 0.0
      %995 = vmatprep.subr.mxu0 0.0
      %996 = vmatpush1.msra.mxu0 0.0
      %997 = vmatprep.subr.mxu0 0.0
      %998 = vmatpush1.msra.mxu0 0.0
      %999 = vmatprep.subr.mxu0 0.0
      %1000 = vmatpush1.msra.mxu0 0.0
      %1001 = vmatprep.mubr.f32.mxu0 0.0
      %1002 = vmatmul.mubr.f32.gmra.mrb[0].mxu0 %v825
      %v1003 = vpop.f32.mrb[0].mxu0
      %v1004 = vadd.f32 %v934, %v1003
      %v1005 = vpop.f32.mrb[0].mxu0
      %1006 = vdwg.mxu0
      %s1007 = scalar_lea.vmem %s4, 256
      %v1008 = vld [vmem:[%s1007] sm:$0xff]
      %v1009 = vld [vmem:[%s1007 + $0x8] sm:$0xff]
      %v1010 = vld [vmem:[%s1007 + $0x10] sm:$0xff]
      %v1011 = vld [vmem:[%s1007 + $0x18] sm:$0xff]
      %v1012 = vld [vmem:[%s1007 + $0x20] sm:$0xff]
      %v1013 = vld [vmem:[%s1007 + $0x28] sm:$0xff]
      %v1014 = vld [vmem:[%s1007 + $0x30] sm:$0xff]
      %v1015 = vld [vmem:[%s1007 + $0x38] sm:$0xff]
      %v1016 = vld [vmem:[%s1007 + $0x40] sm:$0xff]
      %v1017 = vld [vmem:[%s1007 + $0x48] sm:$0xff]
      %v1018 = vld [vmem:[%s1007 + $0x50] sm:$0xff]
      %v1019 = vld [vmem:[%s1007 + $0x58] sm:$0xff]
      %v1020 = vld [vmem:[%s1007 + $0x60] sm:$0xff]
      %v1021 = vld [vmem:[%s1007 + $0x68] sm:$0xff]
      %v1022 = vld [vmem:[%s1007 + $0x70] sm:$0xff]
      %v1023 = vld [vmem:[%s1007 + $0x78] sm:$0xff]
      %vm1024 = vcmask 1045504
      %v1025 = vrot.slane %v825, 2
      %v1026 = vrot.slane %v826, 2
      %v1027 = vsel %vm1024, %v1025, %v1026
      %1029 = vmatprep.subr.mxu0 0.0
      %1030 = vmatpush1.msra.mxu0 %v1008
      %1031 = vmatprep.subr.mxu0 0.0
      %1032 = vmatpush1.msra.mxu0 %v1009
      %1033 = vmatprep.subr.mxu0 0.0
      %1034 = vmatpush1.msra.mxu0 %v1010
      %1035 = vmatprep.subr.mxu0 0.0
      %1036 = vmatpush1.msra.mxu0 %v1011
      %1037 = vmatprep.subr.mxu0 0.0
      %1038 = vmatpush1.msra.mxu0 %v1012
      %1039 = vmatprep.subr.mxu0 0.0
      %1040 = vmatpush1.msra.mxu0 %v1013
      %1041 = vmatprep.subr.mxu0 0.0
      %1042 = vmatpush1.msra.mxu0 %v1014
      %1043 = vmatprep.subr.mxu0 0.0
      %1044 = vmatpush1.msra.mxu0 %v1015
      %1045 = vmatprep.subr.mxu0 0.0
      %1046 = vmatpush1.msra.mxu0 %v1016
      %1047 = vmatprep.subr.mxu0 0.0
      %1048 = vmatpush1.msra.mxu0 %v1017
      %1049 = vmatprep.subr.mxu0 0.0
      %1050 = vmatpush1.msra.mxu0 %v1018
      %1051 = vmatprep.subr.mxu0 0.0
      %1052 = vmatpush1.msra.mxu0 %v1019
      %1053 = vmatprep.subr.mxu0 0.0
      %1054 = vmatpush1.msra.mxu0 %v1020
      %1055 = vmatprep.subr.mxu0 0.0
      %1056 = vmatpush1.msra.mxu0 %v1021
      %1057 = vmatprep.subr.mxu0 0.0
      %1058 = vmatpush1.msra.mxu0 %v1022
      %1059 = vmatprep.subr.mxu0 0.0
      %1060 = vmatpush1.msra.mxu0 %v1023
      %1061 = vmatprep.subr.mxu0 0.0
      %1062 = vmatpush1.msra.mxu0 0.0
      %1063 = vmatprep.subr.mxu0 0.0
      %1064 = vmatpush1.msra.mxu0 0.0
      %1065 = vmatprep.subr.mxu0 0.0
      %1066 = vmatpush1.msra.mxu0 0.0
      %1067 = vmatprep.subr.mxu0 0.0
      %1068 = vmatpush1.msra.mxu0 0.0
      %1069 = vmatprep.subr.mxu0 0.0
      %1070 = vmatpush1.msra.mxu0 0.0
      %1071 = vmatprep.subr.mxu0 0.0
      %1072 = vmatpush1.msra.mxu0 0.0
      %1073 = vmatprep.subr.mxu0 0.0
      %1074 = vmatpush1.msra.mxu0 0.0
      %1075 = vmatprep.subr.mxu0 0.0
      %1076 = vmatpush1.msra.mxu0 0.0
      %1077 = vmatprep.subr.mxu0 0.0
      %1078 = vmatpush1.msra.mxu0 0.0
      %1079 = vmatprep.subr.mxu0 0.0
      %1080 = vmatpush1.msra.mxu0 0.0
      %1081 = vmatprep.subr.mxu0 0.0
      %1082 = vmatpush1.msra.mxu0 0.0
      %1083 = vmatprep.subr.mxu0 0.0
      %1084 = vmatpush1.msra.mxu0 0.0
      %1085 = vmatprep.subr.mxu0 0.0
      %1086 = vmatpush1.msra.mxu0 0.0
      %1087 = vmatprep.subr.mxu0 0.0
      %1088 = vmatpush1.msra.mxu0 0.0
      %1089 = vmatprep.subr.mxu0 0.0
      %1090 = vmatpush1.msra.mxu0 0.0
      %1091 = vmatprep.subr.mxu0 0.0
      %1092 = vmatpush1.msra.mxu0 0.0
      %1093 = vmatprep.mubr.f32.mxu0 0.0
      %1094 = vmatmul.mubr.f32.gmra.mrb[0].mxu0 %v1027
      %v1095 = vpop.f32.mrb[0].mxu0
      %v1096 = vadd.f32 0.0, %v1095
      %v1097 = vpop.f32.mrb[0].mxu0
      %1098 = vdwg.mxu0
      %v1099 = vadd.f32 %v1004, %v1096
      %v1100 = vld [vmem:[%s5] sm:$0x1]
      %v1102 = vlaneseq
      %v1103 = vshrl.u32 %v1102, 7
      %v1104 = vsub.s32 0, %v1103
      %v1105 = vrot.slane %v1100, %v1104
      %v1107 = vmul.f32 %v1099, %v1105
      %v1108 = vld [vmem:[%s6] sm:$0x1]
      %v1110 = vlaneseq
      %v1111 = vshrl.u32 %v1110, 7
      %v1112 = vsub.s32 0, %v1111
      %v1113 = vrot.slane %v1108, %v1112
      %v1115 = vadd.f32 %v1107, %v1113
      %v1116 = vmax.f32 %v1115, 0.0
      %1117 = vst [vmem:[%s252] sm:$0xff] %v1116
      %p1118 = scmp.lt.s32.totalorder %s22, 1
      %s1119 = scalar_select %p1118, %s22, 1
      %p1120 = scmp.lt.s32.totalorder %s23, 1
      %s1121 = scalar_select %p1120, %s23, 1
      %s1122 = smul.addr %s1119, 2
      %s1123 = sadd.s32 %s1121, %s1122
      %s1124 = smul.addr %s1123, 8
      %s1125 = scalar_lea.vmem %s7, %s1124
      // Predicated region
      $region83: #{jasper_final_block.1} parent=43 // pred_check
        %p1126 = pneg %p176
      $region84: #{jasper_final_block.1} parent=43 // pred_check_branch
        %1128 = sbr.rel (%p1126) target = $region86
      $region85: #{jasper_final_block.1} parent=43 // pred_region
        _
      $region86: #{jasper_final_block.1} parent=43 // pred_fallthru
        _
    $region44: #{jasper_final_block.1} parent=5 // pred_fallthru
      _
    %p1129 = scmp.le.s32.totalorder 2, %s13
    // Predicated region
    $region87: #{jasper_final_block.1} parent=5 // pred_check
      %p1130 = pneg %p1129
    $region88: #{jasper_final_block.1} parent=5 // pred_check_branch
      %1132 = sbr.rel (%p1130) target = $region90
    $region89: #{jasper_final_block.1} parent=5 // pred_region
      %s1133 = ssub.s32 %s13, 2
      // Predicated region
      $region91: #{jasper_final_block.1} parent=89 // pred_check
        %p1134 = pneg %p182
      $region92: #{jasper_final_block.1} parent=89 // pred_check_branch
        %1136 = sbr.rel (%p1134) target = $region94
      $region93: #{jasper_final_block.1} parent=89 // pred_region
        %p1137 = scmp.lt.s32.totalorder %s24, 1
        %s1138 = scalar_select %p1137, %s24, 1
        %p1139 = scmp.lt.s32.totalorder %s25, 1
        %s1140 = scalar_select %p1139, %s25, 1
        %s1141 = smul.addr %s1138, 2
        %s1142 = sadd.s32 %s1140, %s1141
        %s1143 = smul.addr %s1142, 8
        %s1144 = scalar_lea.vmem %s7, %s1143
      $region94: #{jasper_final_block.1} parent=89 // pred_fallthru
        _
    $region90: #{jasper_final_block.1} parent=5 // pred_fallthru
      _
  $region6: #{jasper_final_block.1} parent=0 // loop_footer
    %s17 = sadd.s32 1, %s13
  $region7: #{jasper_final_block.1} parent=0 // loop_footer_branch
    %12 = sbr.rel target = $region3
  $region8: #{jasper_final_block.1} parent=0 // loop_exit
    _
  %1145 = vsyncmov [#allocation3]
  %s1146 = vpop.sfrf %1145
  %p1147 = scmp.eq.s32.totalorder %s1146, 0
  %p1148 = pneg %p1147
  %1150 = shalt.err (%p1148)

</llo_original>
